<compile_context>
chip_gen: v5e
topology: v5e:2x2
jax: 0.10.0
libtpu: 0.0.40
codegen_flags: <defaults>
</compile_context>

<pallas_src>
import jax
import jax.numpy as jnp
from jax import lax
from jax.experimental import pallas as pl
from jax.experimental.pallas import tpu as pltpu

# ---- static model dims ----
B = 2          # batch
C_IN = 4       # image channels
H = W = 16     # spatial
C_HID = 8      # hidden conv channels
LATENT = 32    # s_code dim
CH_DIM = 16    # c_code dim (channel symbols)
NOISE_STD = 0.1

FLAT = H * W * C_HID          # 2048 flattened hidden activation
XW_IN = W * C_IN              # 64   fused (x, channel) width of the conv input
XW_HID = W * C_HID            # 128  fused (x, channel) width of the hidden activation
K_ENC = 3 * XW_IN             # 192  encoder banded-conv contraction
K_DEC = 3 * XW_HID            # 384  decoder banded-conv contraction

# packed-bias slab: each small bias gets a 128-aligned slot, decoder fc bias last.
OFF_BENC = 0                  # (1, 128)  encoder banded conv bias
OFF_BFC1 = 128                # (1, 32)   encoder fc bias
OFF_BCH1 = 256                # (1, 16)   channel enc bias
OFF_BCH2 = 384                # (1, 32)   channel dec bias
OFF_BDEC = 512                # (1, 128)  decoder banded conv bias (lanes 64:128 zero)
OFF_BFC2 = 640                # (1, 2048) decoder fc bias
BIAS_W = OFF_BFC2 + FLAT      # 2688

_NT = (((1,), (1,)), ((), ()))  # dot_general dims: contract last dim of both (A @ B^T)


# ------------------------- fused Pallas kernel -------------------------

def _base_net_kernel(
        cols1_ref,    # (B*H, K_ENC)   pre-im2col'd encoder conv input, rows (y, b)
        noise_ref,    # (B, CH_DIM)    AWGN noise
        wenc_ref,     # (K_ENC, XW_HID) banded encoder conv weight
        wfc1t_ref,    # (LATENT, FLAT)  bf16, transposed encoder fc weight (lane-dense)
        wch1_ref,     # (LATENT, CH_DIM)
        wch2_ref,     # (CH_DIM, LATENT)
        wfc2_ref,     # (LATENT, FLAT)  bf16, decoder fc weight (lane-dense)
        wdec_ref,     # (K_DEC, 128)    banded decoder conv weight, cols 64:128 zero
        bias_ref,     # (1, BIAS_W)     packed biases
        codes_ref,    # out (B, 128)    [c_code | c_code_ | s_code | s_code_ | 0]
        img_ref,      # out (B*H, 128)  decoded image rows (y, b), lanes 64:128 zero
        pad2_ref):    # scratch ((H+2)*B, XW_HID) decoder y-halo buffer, rows (y_pad, b)
    f32 = jnp.float32

    # ---- encoder conv3x3(C_IN->C_HID) + ReLU: ONE banded matmul ----
    h = jnp.dot(cols1_ref[...], wenc_ref[...], preferred_element_type=f32)
    h = jnp.maximum(h + bias_ref[:, OFF_BENC:OFF_BENC + XW_HID], 0.0)   # (B*H, XW_HID)

    # ---- flatten(NHWC) in registers -> (B, FLAT), then ONE K=2048 fc matmul ----
    # rows of h are (y, b); chunk y occupies rows [2y, 2y+2) -> contiguous slices,
    # 128-aligned lane concat (no scratch stores / reloads).
    hf = jnp.concatenate([h[2 * i:2 * i + 2, :] for i in range(H)], axis=-1)  # (B, FLAT)
    w1t = wfc1t_ref[...].astype(f32)                                    # bf16 -> f32
    s_code = (lax.dot_general(hf, w1t, _NT, preferred_element_type=f32)
              + bias_ref[:, OFF_BFC1:OFF_BFC1 + LATENT])                # (B, LATENT)

    # ---- channel model: Linear -> AWGN add -> Linear ----
    c_code = (jnp.dot(s_code, wch1_ref[...], preferred_element_type=f32)
              + bias_ref[:, OFF_BCH1:OFF_BCH1 + CH_DIM])                # (B, CH_DIM)
    c_code_n = c_code + noise_ref[...]
    s_code_n = (jnp.dot(c_code_n, wch2_ref[...], preferred_element_type=f32)
                + bias_ref[:, OFF_BCH2:OFF_BCH2 + LATENT])              # (B, LATENT)

    # One lane-dense (B, 128) slab holding all four small code vectors.
    # (Kept as zero-fill + 4 sub-slot stores: an unaligned lane concat is avoided
    #  for lowering safety; this is 5 stores total.)
    codes_ref[...] = jnp.zeros(codes_ref.shape, f32)
    codes_ref[:, 0:CH_DIM] = c_code
    codes_ref[:, CH_DIM:2 * CH_DIM] = c_code_n
    codes_ref[:, 2 * CH_DIM:2 * CH_DIM + LATENT] = s_code
    codes_ref[:, 2 * CH_DIM + LATENT:2 * CH_DIM + 2 * LATENT] = s_code_n

    # ---- decoder: Linear(LATENT->FLAT) + ReLU (stays in vregs) ----
    w2 = wfc2_ref[...].astype(f32)                                      # bf16 -> f32
    h2 = jnp.maximum(
        jnp.dot(s_code_n, w2, preferred_element_type=f32)
        + bias_ref[:, OFF_BFC2:OFF_BFC2 + FLAT], 0.0)                   # (B, FLAT)

    # ---- decoder conv3x3(C_HID->C_IN), same padding ----
    # Zero ONLY the two halo row-pairs; interior is written as 16 lane-aligned
    # chunk stores straight from the h2 value (no flat2 scratch, no reloads).
    pad2_ref[0:B, :] = jnp.zeros((B, XW_HID), f32)
    pad2_ref[(H + 1) * B:(H + 2) * B, :] = jnp.zeros((B, XW_HID), f32)
    for i in range(H):
        pad2_ref[(i + 1) * B:(i + 2) * B, :] = h2[:, i * XW_HID:(i + 1) * XW_HID]

    # im2col over the 3 vertical taps: 3 ref slices + free 128-aligned lane concat.
    cols2 = jnp.concatenate(
        [pad2_ref[dy * B:dy * B + B * H, :] for dy in range(3)], axis=-1)  # (B*H, K_DEC)

    # Banded decoder conv matmul; weight/bias widened to 128 output lanes (cols
    # 64:128 are zero) so the image writeback is ONE unmasked lane-dense store.
    img_ref[...] = (jnp.dot(cols2, wdec_ref[...], preferred_element_type=f32)
                    + bias_ref[:, OFF_BDEC:OFF_BDEC + 128])             # (B*H, 128)


# ------------------------- one-time weight folding -------------------------

def _banded_conv_weight(w_hwio, bias):
    """Fold the 3 horizontal taps (and x zero-padding) of a 3x3 'same' conv into a
    banded block weight so the kernel only needs the 3 vertical im2col taps.

      w_big[dy*W*cin + xin*cin + ci, xout*cout + co] =
          w[dy, dx, ci, co] if xin == xout + dx - 1 (in range) else 0
      b_big = bias tiled over the W output columns.
    """
    cout = w_hwio.shape[3]
    blocks = []
    for dy in range(3):
        m = None
        for dx in range(3):
            t = jnp.kron(jnp.eye(W, k=1 - dx, dtype=w_hwio.dtype), w_hwio[dy, dx])
            m = t if m is None else m + t
        blocks.append(m)                                   # (W*cin, W*cout)
    w_big = jnp.concatenate(blocks, axis=0)                # (3*W*cin, W*cout)
    b_big = jnp.tile(bias, W).reshape(1, W * cout)
    return w_big, b_big


def init_params(key):
    """Raw (PyTorch-like) parameters of the concrete isc_model / ch_model."""
    ks = jax.random.split(key, 6)

    def wmat(k, shape, fan_in):
        return jax.random.normal(k, shape, jnp.float32) * (1.0 / jnp.sqrt(fan_in))

    return {
        # isc_model encoder
        "enc_conv_w": wmat(ks[0], (3, 3, C_IN, C_HID), 3 * 3 * C_IN),
        "enc_conv_b": jnp.zeros((C_HID,), jnp.float32),
        "enc_fc_w": wmat(ks[1], (FLAT, LATENT), FLAT),      # NHWC flatten rows
        "enc_fc_b": jnp.zeros((LATENT,), jnp.float32),
        # channel model
        "ch_enc_w": wmat(ks[2], (LATENT, CH_DIM), LATENT),
        "ch_enc_b": jnp.zeros((CH_DIM,), jnp.float32),
        "ch_dec_w": wmat(ks[3], (CH_DIM, LATENT), CH_DIM),
        "ch_dec_b": jnp.zeros((LATENT,), jnp.float32),
        # isc_model decoder
        "dec_fc_w": wmat(ks[4], (LATENT, FLAT), LATENT),    # NHWC flatten cols
        "dec_fc_b": jnp.zeros((FLAT,), jnp.float32),
        "dec_conv_w": wmat(ks[5], (3, 3, C_HID, C_IN), 3 * 3 * C_HID),
        "dec_conv_b": jnp.zeros((C_IN,), jnp.float32),
    }


def prepare_kernel_params(p):
    """Hoisted out of the per-forward path: banded conv weights, lane-dense /
    bf16 fc weights, and the packed bias slab are built exactly once."""
    wenc, benc = _banded_conv_weight(p["enc_conv_w"], p["enc_conv_b"])
    wdec, bdec = _banded_conv_weight(p["dec_conv_w"], p["dec_conv_b"])
    # Widen the decoder conv output to 128 lanes (zero columns): free in tiled
    # memory, and it makes the image writeback a single unmasked store.
    wdec = jnp.pad(wdec, ((0, 0), (0, 128 - XW_IN)))
    bdec = jnp.pad(bdec, ((0, 0), (0, 128 - XW_IN)))

    bias = jnp.zeros((1, BIAS_W), jnp.float32)
    bias = bias.at[:, OFF_BENC:OFF_BENC + XW_HID].set(benc)
    bias = bias.at[:, OFF_BFC1:OFF_BFC1 + LATENT].set(p["enc_fc_b"].reshape(1, LATENT))
    bias = bias.at[:, OFF_BCH1:OFF_BCH1 + CH_DIM].set(p["ch_enc_b"].reshape(1, CH_DIM))
    bias = bias.at[:, OFF_BCH2:OFF_BCH2 + LATENT].set(p["ch_dec_b"].reshape(1, LATENT))
    bias = bias.at[:, OFF_BDEC:OFF_BDEC + 128].set(bdec)
    bias = bias.at[:, OFF_BFC2:OFF_BFC2 + FLAT].set(p["dec_fc_b"].reshape(1, FLAT))

    return {
        "wenc": wenc,                                        # (192, 128) f32
        "wfc1t": p["enc_fc_w"].T.astype(jnp.bfloat16),       # (32, 2048) bf16 lane-dense
        "wch1": p["ch_enc_w"],                               # (32, 16)
        "wch2": p["ch_dec_w"],                               # (16, 32)
        "wfc2": p["dec_fc_w"].astype(jnp.bfloat16),          # (32, 2048) bf16 lane-dense
        "wdec": wdec,                                        # (384, 128) f32
        "bias": bias,                                        # (1, 2688)  f32
    }


# ------------------------- forward (single fused pallas_call) -------------------------

def base_net_forward(kp, x_nchw, noise):
    # Pure layout plumbing folded into the wrapper (per review): NCHW -> rows
    # ordered (y, b) with fused (x, channel) lanes, zero y-halo, and the 3-tap
    # vertical im2col of the *input* (so the kernel starts at the conv matmul).
    x_ybf = jnp.transpose(x_nchw, (2, 0, 3, 1)).reshape(H, B, XW_IN)   # (H, B, 64)
    xp = jnp.pad(x_ybf, ((1, 1), (0, 0), (0, 0)))                      # (H+2, B, 64)
    cols1 = jnp.concatenate([xp[dy:dy + H] for dy in range(3)],
                            axis=-1).reshape(B * H, K_ENC)             # (32, 192)

    codes, img = pl.pallas_call(
        _base_net_kernel,
        out_shape=(
            jax.ShapeDtypeStruct((B, 128), jnp.float32),       # code slab
            jax.ShapeDtypeStruct((B * H, 128), jnp.float32),   # decoded image slab
        ),
        scratch_shapes=[
            pltpu.VMEM(((H + 2) * B, XW_HID), jnp.float32),    # decoder y-halo buffer
        ],
    )(cols1, noise, kp["wenc"], kp["wfc1t"], kp["wch1"], kp["wch2"],
      kp["wfc2"], kp["wdec"], kp["bias"])

    c_code = codes[:, 0:CH_DIM]
    c_code_ = codes[:, CH_DIM:2 * CH_DIM]
    s_code = codes[:, 2 * CH_DIM:2 * CH_DIM + LATENT]
    s_code_ = codes[:, 2 * CH_DIM + LATENT:2 * CH_DIM + 2 * LATENT]
    # image rows are (y, b); lanes 64:128 are zero padding -> slice + un-fuse + NCHW
    im = img[:, :XW_IN].reshape(H, B, W, C_IN)
    im_decoding = jnp.transpose(im, (1, 3, 0, 2))              # (B, C_IN, H, W)
    return c_code, c_code_, s_code, s_code_, im_decoding


# ------------------------- main -------------------------

if __name__ == "__main__":
    key = jax.random.PRNGKey(0)
    k_x, k_noise, k_param = jax.random.split(key, 3)

    x = jax.random.normal(k_x, (B, C_IN, H, W), jnp.float32)           # NCHW input
    noise = NOISE_STD * jax.random.normal(k_noise, (B, CH_DIM), jnp.float32)
    params = prepare_kernel_params(init_params(k_param))               # built ONCE

    fwd = jax.jit(base_net_forward)
    outs = fwd(params, x, noise)
    jax.block_until_ready(outs)
    c_code, c_code_, s_code, s_code_, im_decoding = outs

    assert c_code.shape == (B, CH_DIM)
    assert c_code_.shape == (B, CH_DIM)
    assert s_code.shape == (B, LATENT)
    assert s_code_.shape == (B, LATENT)
    assert im_decoding.shape == (B, C_IN, H, W)
    assert bool(jnp.all(jnp.isfinite(im_decoding)))
    assert bool(jnp.all(jnp.isfinite(s_code_)))

    print("KERNEL_OK")
</pallas_src>

<mosaic_0001>
module attributes {stable_mosaic.version = 11 : i64} {
  func.func @_base_net_kernel(%arg0: memref<32x192xf32, #tpu.memory_space<vmem>>, %arg1: memref<2x16xf32, #tpu.memory_space<vmem>>, %arg2: memref<192x128xf32, #tpu.memory_space<vmem>>, %arg3: memref<32x2048xbf16, #tpu.memory_space<vmem>>, %arg4: memref<32x16xf32, #tpu.memory_space<vmem>>, %arg5: memref<16x32xf32, #tpu.memory_space<vmem>>, %arg6: memref<32x2048xbf16, #tpu.memory_space<vmem>>, %arg7: memref<384x128xf32, #tpu.memory_space<vmem>>, %arg8: memref<1x2688xf32, #tpu.memory_space<vmem>>, %arg9: memref<2x128xf32, #tpu.memory_space<vmem>>, %arg10: memref<32x128xf32, #tpu.memory_space<vmem>>, %arg11: memref<36x128xf32, #tpu.memory_space<vmem>>) attributes {dimension_semantics = [], scalar_prefetch = 0 : i64, scratch_operands = 1 : i64, tpu.core_type = #tpu.core_type<tc>} {
    %c0 = arith.constant 0 : index
    %c0_0 = arith.constant 0 : index
    %0 = vector.load %arg0[%c0, %c0_0] : memref<32x192xf32, #tpu.memory_space<vmem>>, vector<32x192xf32>
    %c0_1 = arith.constant 0 : index
    %c0_2 = arith.constant 0 : index
    %1 = vector.load %arg2[%c0_1, %c0_2] : memref<192x128xf32, #tpu.memory_space<vmem>>, vector<192x128xf32>
    %cst = arith.constant dense<0.000000e+00> : vector<32x128xf32>
    %2 = tpu.matmul %0, %1, %cst {dimension_numbers = #tpu.dot_dimension_numbers<[1], [0], [0], [1], [0, 0, 1, 1], [], []>} : vector<32x192xf32>, vector<192x128xf32>, vector<32x128xf32> -> vector<32x128xf32>
    %c0_3 = arith.constant 0 : index
    %c0_4 = arith.constant 0 : index
    %3 = vector.load %arg8[%c0_3, %c0_4] : memref<1x2688xf32, #tpu.memory_space<vmem>>, vector<1x128xf32>
    %4 = vector.broadcast %3 : vector<1x128xf32> to vector<32x128xf32>
    %5 = arith.addf %2, %4 : vector<32x128xf32>
    %cst_5 = arith.constant 0.000000e+00 : f32
    %6 = vector.broadcast %cst_5 : f32 to vector<32x128xf32>
    %7 = arith.maximumf %5, %6 : vector<32x128xf32>
    %8 = vector.extract_strided_slice %7 {offsets = [0, 0], sizes = [2, 128], strides = [1, 1]} : vector<32x128xf32> to vector<2x128xf32>
    %9 = vector.extract_strided_slice %7 {offsets = [2, 0], sizes = [2, 128], strides = [1, 1]} : vector<32x128xf32> to vector<2x128xf32>
    %10 = vector.extract_strided_slice %7 {offsets = [4, 0], sizes = [2, 128], strides = [1, 1]} : vector<32x128xf32> to vector<2x128xf32>
    %11 = vector.extract_strided_slice %7 {offsets = [6, 0], sizes = [2, 128], strides = [1, 1]} : vector<32x128xf32> to vector<2x128xf32>
    %12 = vector.extract_strided_slice %7 {offsets = [8, 0], sizes = [2, 128], strides = [1, 1]} : vector<32x128xf32> to vector<2x128xf32>
    %13 = vector.extract_strided_slice %7 {offsets = [10, 0], sizes = [2, 128], strides = [1, 1]} : vector<32x128xf32> to vector<2x128xf32>
    %14 = vector.extract_strided_slice %7 {offsets = [12, 0], sizes = [2, 128], strides = [1, 1]} : vector<32x128xf32> to vector<2x128xf32>
    %15 = vector.extract_strided_slice %7 {offsets = [14, 0], sizes = [2, 128], strides = [1, 1]} : vector<32x128xf32> to vector<2x128xf32>
    %16 = vector.extract_strided_slice %7 {offsets = [16, 0], sizes = [2, 128], strides = [1, 1]} : vector<32x128xf32> to vector<2x128xf32>
    %17 = vector.extract_strided_slice %7 {offsets = [18, 0], sizes = [2, 128], strides = [1, 1]} : vector<32x128xf32> to vector<2x128xf32>
    %18 = vector.extract_strided_slice %7 {offsets = [20, 0], sizes = [2, 128], strides = [1, 1]} : vector<32x128xf32> to vector<2x128xf32>
    %19 = vector.extract_strided_slice %7 {offsets = [22, 0], sizes = [2, 128], strides = [1, 1]} : vector<32x128xf32> to vector<2x128xf32>
    %20 = vector.extract_strided_slice %7 {offsets = [24, 0], sizes = [2, 128], strides = [1, 1]} : vector<32x128xf32> to vector<2x128xf32>
    %21 = vector.extract_strided_slice %7 {offsets = [26, 0], sizes = [2, 128], strides = [1, 1]} : vector<32x128xf32> to vector<2x128xf32>
    %22 = vector.extract_strided_slice %7 {offsets = [28, 0], sizes = [2, 128], strides = [1, 1]} : vector<32x128xf32> to vector<2x128xf32>
    %23 = vector.extract_strided_slice %7 {offsets = [30, 0], sizes = [2, 128], strides = [1, 1]} : vector<32x128xf32> to vector<2x128xf32>
    %24 = tpu.concatenate %8, %9, %10, %11, %12, %13, %14, %15, %16, %17, %18, %19, %20, %21, %22, %23 in 1 : vector<2x128xf32>, vector<2x128xf32>, vector<2x128xf32>, vector<2x128xf32>, vector<2x128xf32>, vector<2x128xf32>, vector<2x128xf32>, vector<2x128xf32>, vector<2x128xf32>, vector<2x128xf32>, vector<2x128xf32>, vector<2x128xf32>, vector<2x128xf32>, vector<2x128xf32>, vector<2x128xf32>, vector<2x128xf32> -> vector<2x2048xf32>
    %c0_6 = arith.constant 0 : index
    %c0_7 = arith.constant 0 : index
    %25 = vector.load %arg3[%c0_6, %c0_7] : memref<32x2048xbf16, #tpu.memory_space<vmem>>, vector<32x2048xbf16>
    %26 = arith.extf %25 : vector<32x2048xbf16> to vector<32x2048xf32>
    %cst_8 = arith.constant dense<0.000000e+00> : vector<2x32xf32>
    %27 = tpu.matmul %24, %26, %cst_8 {dimension_numbers = #tpu.dot_dimension_numbers<[1], [1], [0], [0], [0, 0, 1, 0], [], []>} : vector<2x2048xf32>, vector<32x2048xf32>, vector<2x32xf32> -> vector<2x32xf32>
    %c0_9 = arith.constant 0 : index
    %c128 = arith.constant 128 : index
    %28 = vector.load %arg8[%c0_9, %c128] : memref<1x2688xf32, #tpu.memory_space<vmem>>, vector<1x32xf32>
    %29 = vector.broadcast %28 : vector<1x32xf32> to vector<2x32xf32>
    %30 = arith.addf %27, %29 : vector<2x32xf32>
    %c0_10 = arith.constant 0 : index
    %c0_11 = arith.constant 0 : index
    %31 = vector.load %arg4[%c0_10, %c0_11] : memref<32x16xf32, #tpu.memory_space<vmem>>, vector<32x16xf32>
    %cst_12 = arith.constant dense<0.000000e+00> : vector<2x16xf32>
    %32 = tpu.matmul %30, %31, %cst_12 {dimension_numbers = #tpu.dot_dimension_numbers<[1], [0], [0], [1], [0, 0, 1, 1], [], []>} : vector<2x32xf32>, vector<32x16xf32>, vector<2x16xf32> -> vector<2x16xf32>
    %c0_13 = arith.constant 0 : index
    %c256 = arith.constant 256 : index
    %33 = vector.load %arg8[%c0_13, %c256] : memref<1x2688xf32, #tpu.memory_space<vmem>>, vector<1x16xf32>
    %34 = vector.broadcast %33 : vector<1x16xf32> to vector<2x16xf32>
    %35 = arith.addf %32, %34 : vector<2x16xf32>
    %c0_14 = arith.constant 0 : index
    %c0_15 = arith.constant 0 : index
    %36 = vector.load %arg1[%c0_14, %c0_15] : memref<2x16xf32, #tpu.memory_space<vmem>>, vector<2x16xf32>
    %37 = arith.addf %35, %36 : vector<2x16xf32>
    %c0_16 = arith.constant 0 : index
    %c0_17 = arith.constant 0 : index
    %38 = vector.load %arg5[%c0_16, %c0_17] : memref<16x32xf32, #tpu.memory_space<vmem>>, vector<16x32xf32>
    %cst_18 = arith.constant dense<0.000000e+00> : vector<2x32xf32>
    %39 = tpu.matmul %37, %38, %cst_18 {dimension_numbers = #tpu.dot_dimension_numbers<[1], [0], [0], [1], [0, 0, 1, 1], [], []>} : vector<2x16xf32>, vector<16x32xf32>, vector<2x32xf32> -> vector<2x32xf32>
    %c0_19 = arith.constant 0 : index
    %c384 = arith.constant 384 : index
    %40 = vector.load %arg8[%c0_19, %c384] : memref<1x2688xf32, #tpu.memory_space<vmem>>, vector<1x32xf32>
    %41 = vector.broadcast %40 : vector<1x32xf32> to vector<2x32xf32>
    %42 = arith.addf %39, %41 : vector<2x32xf32>
    %cst_20 = arith.constant 0.000000e+00 : f32
    %43 = vector.broadcast %cst_20 : f32 to vector<2x128xf32>
    %c0_21 = arith.constant 0 : index
    %c0_22 = arith.constant 0 : index
    %44 = vector.load %arg9[%c0_21, %c0_22] : memref<2x128xf32, #tpu.memory_space<vmem>>, vector<2x128xf32>
    tpu.vector_store %arg9[%c0_21, %c0_22], %43 {strides = array<i32>} : memref<2x128xf32, #tpu.memory_space<vmem>>, vector<2x128xf32>,
    %c0_23 = arith.constant 0 : index
    %c0_24 = arith.constant 0 : index
    %45 = vector.load %arg9[%c0_23, %c0_24] : memref<2x128xf32, #tpu.memory_space<vmem>>, vector<2x16xf32>
    tpu.vector_store %arg9[%c0_23, %c0_24], %35 {strides = array<i32>} : memref<2x128xf32, #tpu.memory_space<vmem>>, vector<2x16xf32>,
    %c0_25 = arith.constant 0 : index
    %c16 = arith.constant 16 : index
    %46 = vector.load %arg9[%c0_25, %c16] : memref<2x128xf32, #tpu.memory_space<vmem>>, vector<2x16xf32>
    tpu.vector_store %arg9[%c0_25, %c16], %37 {strides = array<i32>} : memref<2x128xf32, #tpu.memory_space<vmem>>, vector<2x16xf32>,
    %c0_26 = arith.constant 0 : index
    %c32 = arith.constant 32 : index
    %47 = vector.load %arg9[%c0_26, %c32] : memref<2x128xf32, #tpu.memory_space<vmem>>, vector<2x32xf32>
    tpu.vector_store %arg9[%c0_26, %c32], %30 {strides = array<i32>} : memref<2x128xf32, #tpu.memory_space<vmem>>, vector<2x32xf32>,
    %c0_27 = arith.constant 0 : index
    %c64 = arith.constant 64 : index
    %48 = vector.load %arg9[%c0_27, %c64] : memref<2x128xf32, #tpu.memory_space<vmem>>, vector<2x32xf32>
    tpu.vector_store %arg9[%c0_27, %c64], %42 {strides = array<i32>} : memref<2x128xf32, #tpu.memory_space<vmem>>, vector<2x32xf32>,
    %c0_28 = arith.constant 0 : index
    %c0_29 = arith.constant 0 : index
    %49 = vector.load %arg6[%c0_28, %c0_29] : memref<32x2048xbf16, #tpu.memory_space<vmem>>, vector<32x2048xbf16>
    %50 = arith.extf %49 : vector<32x2048xbf16> to vector<32x2048xf32>
    %cst_30 = arith.constant dense<0.000000e+00> : vector<2x2048xf32>
    %51 = tpu.matmul %42, %50, %cst_30 {dimension_numbers = #tpu.dot_dimension_numbers<[1], [0], [0], [1], [0, 0, 1, 1], [], []>} : vector<2x32xf32>, vector<32x2048xf32>, vector<2x2048xf32> -> vector<2x2048xf32>
    %c0_31 = arith.constant 0 : index
    %c640 = arith.constant 640 : index
    %52 = vector.load %arg8[%c0_31, %c640] : memref<1x2688xf32, #tpu.memory_space<vmem>>, vector<1x2048xf32>
    %53 = vector.broadcast %52 : vector<1x2048xf32> to vector<2x2048xf32>
    %54 = arith.addf %51, %53 : vector<2x2048xf32>
    %cst_32 = arith.constant 0.000000e+00 : f32
    %55 = vector.broadcast %cst_32 : f32 to vector<2x2048xf32>
    %56 = arith.maximumf %54, %55 : vector<2x2048xf32>
    %cst_33 = arith.constant 0.000000e+00 : f32
    %57 = vector.broadcast %cst_33 : f32 to vector<2x128xf32>
    %c0_34 = arith.constant 0 : index
    %c0_35 = arith.constant 0 : index
    %58 = vector.load %arg11[%c0_34, %c0_35] : memref<36x128xf32, #tpu.memory_space<vmem>>, vector<2x128xf32>
    tpu.vector_store %arg11[%c0_34, %c0_35], %57 {strides = array<i32>} : memref<36x128xf32, #tpu.memory_space<vmem>>, vector<2x128xf32>,
    %cst_36 = arith.constant 0.000000e+00 : f32
    %59 = vector.broadcast %cst_36 : f32 to vector<2x128xf32>
    %c34 = arith.constant 34 : index
    %c0_37 = arith.constant 0 : index
    %60 = vector.load %arg11[%c34, %c0_37] : memref<36x128xf32, #tpu.memory_space<vmem>>, vector<2x128xf32>
    tpu.vector_store %arg11[%c34, %c0_37], %59 {strides = array<i32>} : memref<36x128xf32, #tpu.memory_space<vmem>>, vector<2x128xf32>,
    %61 = vector.extract_strided_slice %56 {offsets = [0, 0], sizes = [2, 128], strides = [1, 1]} : vector<2x2048xf32> to vector<2x128xf32>
    %c2 = arith.constant 2 : index
    %c0_38 = arith.constant 0 : index
    %62 = vector.load %arg11[%c2, %c0_38] : memref<36x128xf32, #tpu.memory_space<vmem>>, vector<2x128xf32>
    tpu.vector_store %arg11[%c2, %c0_38], %61 {strides = array<i32>} : memref<36x128xf32, #tpu.memory_space<vmem>>, vector<2x128xf32>,
    %63 = vector.extract_strided_slice %56 {offsets = [0, 128], sizes = [2, 128], strides = [1, 1]} : vector<2x2048xf32> to vector<2x128xf32>
    %c4 = arith.constant 4 : index
    %c0_39 = arith.constant 0 : index
    %64 = vector.load %arg11[%c4, %c0_39] : memref<36x128xf32, #tpu.memory_space<vmem>>, vector<2x128xf32>
    tpu.vector_store %arg11[%c4, %c0_39], %63 {strides = array<i32>} : memref<36x128xf32, #tpu.memory_space<vmem>>, vector<2x128xf32>,
    %65 = vector.extract_strided_slice %56 {offsets = [0, 256], sizes = [2, 128], strides = [1, 1]} : vector<2x2048xf32> to vector<2x128xf32>
    %c6 = arith.constant 6 : index
    %c0_40 = arith.constant 0 : index
    %66 = vector.load %arg11[%c6, %c0_40] : memref<36x128xf32, #tpu.memory_space<vmem>>, vector<2x128xf32>
    tpu.vector_store %arg11[%c6, %c0_40], %65 {strides = array<i32>} : memref<36x128xf32, #tpu.memory_space<vmem>>, vector<2x128xf32>,
    %67 = vector.extract_strided_slice %56 {offsets = [0, 384], sizes = [2, 128], strides = [1, 1]} : vector<2x2048xf32> to vector<2x128xf32>
    %c8 = arith.constant 8 : index
    %c0_41 = arith.constant 0 : index
    %68 = vector.load %arg11[%c8, %c0_41] : memref<36x128xf32, #tpu.memory_space<vmem>>, vector<2x128xf32>
    tpu.vector_store %arg11[%c8, %c0_41], %67 {strides = array<i32>} : memref<36x128xf32, #tpu.memory_space<vmem>>, vector<2x128xf32>,
    %69 = vector.extract_strided_slice %56 {offsets = [0, 512], sizes = [2, 128], strides = [1, 1]} : vector<2x2048xf32> to vector<2x128xf32>
    %c10 = arith.constant 10 : index
    %c0_42 = arith.constant 0 : index
    %70 = vector.load %arg11[%c10, %c0_42] : memref<36x128xf32, #tpu.memory_space<vmem>>, vector<2x128xf32>
    tpu.vector_store %arg11[%c10, %c0_42], %69 {strides = array<i32>} : memref<36x128xf32, #tpu.memory_space<vmem>>, vector<2x128xf32>,
    %71 = vector.extract_strided_slice %56 {offsets = [0, 640], sizes = [2, 128], strides = [1, 1]} : vector<2x2048xf32> to vector<2x128xf32>
    %c12 = arith.constant 12 : index
    %c0_43 = arith.constant 0 : index
    %72 = vector.load %arg11[%c12, %c0_43] : memref<36x128xf32, #tpu.memory_space<vmem>>, vector<2x128xf32>
    tpu.vector_store %arg11[%c12, %c0_43], %71 {strides = array<i32>} : memref<36x128xf32, #tpu.memory_space<vmem>>, vector<2x128xf32>,
    %73 = vector.extract_strided_slice %56 {offsets = [0, 768], sizes = [2, 128], strides = [1, 1]} : vector<2x2048xf32> to vector<2x128xf32>
    %c14 = arith.constant 14 : index
    %c0_44 = arith.constant 0 : index
    %74 = vector.load %arg11[%c14, %c0_44] : memref<36x128xf32, #tpu.memory_space<vmem>>, vector<2x128xf32>
    tpu.vector_store %arg11[%c14, %c0_44], %73 {strides = array<i32>} : memref<36x128xf32, #tpu.memory_space<vmem>>, vector<2x128xf32>,
    %75 = vector.extract_strided_slice %56 {offsets = [0, 896], sizes = [2, 128], strides = [1, 1]} : vector<2x2048xf32> to vector<2x128xf32>
    %c16_45 = arith.constant 16 : index
    %c0_46 = arith.constant 0 : index
    %76 = vector.load %arg11[%c16_45, %c0_46] : memref<36x128xf32, #tpu.memory_space<vmem>>, vector<2x128xf32>
    tpu.vector_store %arg11[%c16_45, %c0_46], %75 {strides = array<i32>} : memref<36x128xf32, #tpu.memory_space<vmem>>, vector<2x128xf32>,
    %77 = vector.extract_strided_slice %56 {offsets = [0, 1024], sizes = [2, 128], strides = [1, 1]} : vector<2x2048xf32> to vector<2x128xf32>
    %c18 = arith.constant 18 : index
    %c0_47 = arith.constant 0 : index
    %78 = vector.load %arg11[%c18, %c0_47] : memref<36x128xf32, #tpu.memory_space<vmem>>, vector<2x128xf32>
    tpu.vector_store %arg11[%c18, %c0_47], %77 {strides = array<i32>} : memref<36x128xf32, #tpu.memory_space<vmem>>, vector<2x128xf32>,
    %79 = vector.extract_strided_slice %56 {offsets = [0, 1152], sizes = [2, 128], strides = [1, 1]} : vector<2x2048xf32> to vector<2x128xf32>
    %c20 = arith.constant 20 : index
    %c0_48 = arith.constant 0 : index
    %80 = vector.load %arg11[%c20, %c0_48] : memref<36x128xf32, #tpu.memory_space<vmem>>, vector<2x128xf32>
    tpu.vector_store %arg11[%c20, %c0_48], %79 {strides = array<i32>} : memref<36x128xf32, #tpu.memory_space<vmem>>, vector<2x128xf32>,
    %81 = vector.extract_strided_slice %56 {offsets = [0, 1280], sizes = [2, 128], strides = [1, 1]} : vector<2x2048xf32> to vector<2x128xf32>
    %c22 = arith.constant 22 : index
    %c0_49 = arith.constant 0 : index
    %82 = vector.load %arg11[%c22, %c0_49] : memref<36x128xf32, #tpu.memory_space<vmem>>, vector<2x128xf32>
    tpu.vector_store %arg11[%c22, %c0_49], %81 {strides = array<i32>} : memref<36x128xf32, #tpu.memory_space<vmem>>, vector<2x128xf32>,
    %83 = vector.extract_strided_slice %56 {offsets = [0, 1408], sizes = [2, 128], strides = [1, 1]} : vector<2x2048xf32> to vector<2x128xf32>
    %c24 = arith.constant 24 : index
    %c0_50 = arith.constant 0 : index
    %84 = vector.load %arg11[%c24, %c0_50] : memref<36x128xf32, #tpu.memory_space<vmem>>, vector<2x128xf32>
    tpu.vector_store %arg11[%c24, %c0_50], %83 {strides = array<i32>} : memref<36x128xf32, #tpu.memory_space<vmem>>, vector<2x128xf32>,
    %85 = vector.extract_strided_slice %56 {offsets = [0, 1536], sizes = [2, 128], strides = [1, 1]} : vector<2x2048xf32> to vector<2x128xf32>
    %c26 = arith.constant 26 : index
    %c0_51 = arith.constant 0 : index
    %86 = vector.load %arg11[%c26, %c0_51] : memref<36x128xf32, #tpu.memory_space<vmem>>, vector<2x128xf32>
    tpu.vector_store %arg11[%c26, %c0_51], %85 {strides = array<i32>} : memref<36x128xf32, #tpu.memory_space<vmem>>, vector<2x128xf32>,
    %87 = vector.extract_strided_slice %56 {offsets = [0, 1664], sizes = [2, 128], strides = [1, 1]} : vector<2x2048xf32> to vector<2x128xf32>
    %c28 = arith.constant 28 : index
    %c0_52 = arith.constant 0 : index
    %88 = vector.load %arg11[%c28, %c0_52] : memref<36x128xf32, #tpu.memory_space<vmem>>, vector<2x128xf32>
    tpu.vector_store %arg11[%c28, %c0_52], %87 {strides = array<i32>} : memref<36x128xf32, #tpu.memory_space<vmem>>, vector<2x128xf32>,
    %89 = vector.extract_strided_slice %56 {offsets = [0, 1792], sizes = [2, 128], strides = [1, 1]} : vector<2x2048xf32> to vector<2x128xf32>
    %c30 = arith.constant 30 : index
    %c0_53 = arith.constant 0 : index
    %90 = vector.load %arg11[%c30, %c0_53] : memref<36x128xf32, #tpu.memory_space<vmem>>, vector<2x128xf32>
    tpu.vector_store %arg11[%c30, %c0_53], %89 {strides = array<i32>} : memref<36x128xf32, #tpu.memory_space<vmem>>, vector<2x128xf32>,
    %91 = vector.extract_strided_slice %56 {offsets = [0, 1920], sizes = [2, 128], strides = [1, 1]} : vector<2x2048xf32> to vector<2x128xf32>
    %c32_54 = arith.constant 32 : index
    %c0_55 = arith.constant 0 : index
    %92 = vector.load %arg11[%c32_54, %c0_55] : memref<36x128xf32, #tpu.memory_space<vmem>>, vector<2x128xf32>
    tpu.vector_store %arg11[%c32_54, %c0_55], %91 {strides = array<i32>} : memref<36x128xf32, #tpu.memory_space<vmem>>, vector<2x128xf32>,
    %c0_56 = arith.constant 0 : index
    %c0_57 = arith.constant 0 : index
    %93 = vector.load %arg11[%c0_56, %c0_57] : memref<36x128xf32, #tpu.memory_space<vmem>>, vector<32x128xf32>
    %c2_58 = arith.constant 2 : index
    %c0_59 = arith.constant 0 : index
    %94 = vector.load %arg11[%c2_58, %c0_59] : memref<36x128xf32, #tpu.memory_space<vmem>>, vector<32x128xf32>
    %c4_60 = arith.constant 4 : index
    %c0_61 = arith.constant 0 : index
    %95 = vector.load %arg11[%c4_60, %c0_61] : memref<36x128xf32, #tpu.memory_space<vmem>>, vector<32x128xf32>
    %96 = tpu.concatenate %93, %94, %95 in 1 : vector<32x128xf32>, vector<32x128xf32>, vector<32x128xf32> -> vector<32x384xf32>
    %c0_62 = arith.constant 0 : index
    %c0_63 = arith.constant 0 : index
    %97 = vector.load %arg7[%c0_62, %c0_63] : memref<384x128xf32, #tpu.memory_space<vmem>>, vector<384x128xf32>
    %cst_64 = arith.constant dense<0.000000e+00> : vector<32x128xf32>
    %98 = tpu.matmul %96, %97, %cst_64 {dimension_numbers = #tpu.dot_dimension_numbers<[1], [0], [0], [1], [0, 0, 1, 1], [], []>} : vector<32x384xf32>, vector<384x128xf32>, vector<32x128xf32> -> vector<32x128xf32>
    %c0_65 = arith.constant 0 : index
    %c512 = arith.constant 512 : index
    %99 = vector.load %arg8[%c0_65, %c512] : memref<1x2688xf32, #tpu.memory_space<vmem>>, vector<1x128xf32>
    %100 = vector.broadcast %99 : vector<1x128xf32> to vector<32x128xf32>
    %101 = arith.addf %98, %100 : vector<32x128xf32>
    %c0_66 = arith.constant 0 : index
    %c0_67 = arith.constant 0 : index
    %102 = vector.load %arg10[%c0_66, %c0_67] : memref<32x128xf32, #tpu.memory_space<vmem>>, vector<32x128xf32>
    tpu.vector_store %arg10[%c0_66, %c0_67], %101 {strides = array<i32>} : memref<32x128xf32, #tpu.memory_space<vmem>>, vector<32x128xf32>,
    return
  }
}

</mosaic_0001>

<llo_original>
// kernel: base_net_forward.1
$region0: #{base_net_forward.1}
  #allocation0 [shape = 'u32[]', space=smem, size = 0x4, offset = 0x4, fixed_abs, tag = 'smem constant byte address 0x4 - core index']
  #allocation1 [shape = 'u32[72,128]{1,0:T(1,128)}', space=vmem, size = 0x9000, scoped, tag = 'internal scratch']
  #allocation2 [shape = 'f32[36,128]{1,0:T(8,128)}', space=vmem, size = 0x5000, scoped, tag = 'scratch operand']
  %s0 = inlined_call_operand.vmem [shape: f32[32,192], index: 0, kind: input, shape index: {}]
  %s1 = inlined_call_operand.vmem [shape: f32[2,16], index: 1, kind: input, shape index: {}]
  %s2 = inlined_call_operand.vmem [shape: f32[192,128], index: 2, kind: input, shape index: {}]
  %s3 = inlined_call_operand.vmem [shape: bf16[32,2048], index: 3, kind: input, shape index: {}]
  %s4 = inlined_call_operand.vmem [shape: f32[32,16], index: 4, kind: input, shape index: {}]
  %s5 = inlined_call_operand.vmem [shape: f32[16,32], index: 5, kind: input, shape index: {}]
  %s6 = inlined_call_operand.vmem [shape: bf16[32,2048], index: 6, kind: input, shape index: {}]
  %s7 = inlined_call_operand.vmem [shape: f32[384,128], index: 7, kind: input, shape index: {}]
  %s8 = inlined_call_operand.vmem [shape: f32[1,2688], index: 8, kind: input, shape index: {}]
  %s9 = inlined_call_operand.vmem [shape: f32[2,128], index: 9, kind: output, shape index: {0}]
  %s10 = inlined_call_operand.vmem [shape: f32[32,128], index: 10, kind: output, shape index: {1}]
  %11 = xla_tuple %s9, %s10
  %s12 = sld [smem:[#allocation0]]
  $region54: #{base_net_forward.1} parent=0
    _
  %s14 = ssub.s32 1, %s12
  %s15 = scalar_select 0, %s14, %s12
  // Predicated region
  $region2: #{base_net_forward.1} parent=0 // pred_check
    _
  $region3: #{base_net_forward.1} parent=0 // pred_check_branch
    %17 = sbr.rel (0) target = $region5
  $region4: #{base_net_forward.1} parent=0 // pred_region
    _
  $region5: #{base_net_forward.1} parent=0 // pred_fallthru
    _
  // Predicated region
  $region6: #{base_net_forward.1} parent=0 // pred_check
    _
  $region7: #{base_net_forward.1} parent=0 // pred_check_branch
    %19 = sbr.rel (0) target = $region9
  $region8: #{base_net_forward.1} parent=0 // pred_region
    _
  $region9: #{base_net_forward.1} parent=0 // pred_fallthru
    _
  // Predicated region
  $region10: #{base_net_forward.1} parent=0 // pred_check
    _
  $region11: #{base_net_forward.1} parent=0 // pred_check_branch
    %21 = sbr.rel (0) target = $region13
  $region12: #{base_net_forward.1} parent=0 // pred_region
    _
  $region13: #{base_net_forward.1} parent=0 // pred_fallthru
    _
  // Predicated region
  $region14: #{base_net_forward.1} parent=0 // pred_check
    _
  $region15: #{base_net_forward.1} parent=0 // pred_check_branch
    %23 = sbr.rel (0) target = $region17
  $region16: #{base_net_forward.1} parent=0 // pred_region
    _
  $region17: #{base_net_forward.1} parent=0 // pred_fallthru
    _
  // Predicated region
  $region18: #{base_net_forward.1} parent=0 // pred_check
    _
  $region19: #{base_net_forward.1} parent=0 // pred_check_branch
    %25 = sbr.rel (0) target = $region21
  $region20: #{base_net_forward.1} parent=0 // pred_region
    _
  $region21: #{base_net_forward.1} parent=0 // pred_fallthru
    _
  // Predicated region
  $region22: #{base_net_forward.1} parent=0 // pred_check
    _
  $region23: #{base_net_forward.1} parent=0 // pred_check_branch
    %27 = sbr.rel (0) target = $region25
  $region24: #{base_net_forward.1} parent=0 // pred_region
    _
  $region25: #{base_net_forward.1} parent=0 // pred_fallthru
    _
  // Predicated region
  $region26: #{base_net_forward.1} parent=0 // pred_check
    _
  $region27: #{base_net_forward.1} parent=0 // pred_check_branch
    %29 = sbr.rel (0) target = $region29
  $region28: #{base_net_forward.1} parent=0 // pred_region
    _
  $region29: #{base_net_forward.1} parent=0 // pred_fallthru
    _
  // Predicated region
  $region30: #{base_net_forward.1} parent=0 // pred_check
    _
  $region31: #{base_net_forward.1} parent=0 // pred_check_branch
    %31 = sbr.rel (0) target = $region33
  $region32: #{base_net_forward.1} parent=0 // pred_region
    _
  $region33: #{base_net_forward.1} parent=0 // pred_fallthru
    _
  // Predicated region
  $region34: #{base_net_forward.1} parent=0 // pred_check
    _
  $region35: #{base_net_forward.1} parent=0 // pred_check_branch
    %33 = sbr.rel (0) target = $region37
  $region36: #{base_net_forward.1} parent=0 // pred_region
    _
  $region37: #{base_net_forward.1} parent=0 // pred_fallthru
    _
  %v34 = vld [vmem:[%s0] sm:$0xff]
  %v35 = vld [vmem:[%s0 + $0x8] sm:$0xff]
  %v36 = vld [vmem:[%s0 + $0x10] sm:$0xff]
  %v37 = vld [vmem:[%s0 + $0x18] sm:$0xff]
  %v38 = vld [vmem:[%s0 + $0x20] sm:$0xff]
  %v39 = vld [vmem:[%s0 + $0x28] sm:$0xff]
  %v40 = vld [vmem:[%s0 + $0x30] sm:$0xff]
  %v41 = vld [vmem:[%s0 + $0x38] sm:$0xff]
  %v42 = vld [vmem:[%s2] sm:$0xff]
  %v43 = vld [vmem:[%s2 + $0x8] sm:$0xff]
  %v44 = vld [vmem:[%s2 + $0x10] sm:$0xff]
  %v45 = vld [vmem:[%s2 + $0x18] sm:$0xff]
  %v46 = vld [vmem:[%s2 + $0x20] sm:$0xff]
  %v47 = vld [vmem:[%s2 + $0x28] sm:$0xff]
  %v48 = vld [vmem:[%s2 + $0x30] sm:$0xff]
  %v49 = vld [vmem:[%s2 + $0x38] sm:$0xff]
  %v50 = vld [vmem:[%s2 + $0x40] sm:$0xff]
  %v51 = vld [vmem:[%s2 + $0x48] sm:$0xff]
  %v52 = vld [vmem:[%s2 + $0x50] sm:$0xff]
  %v53 = vld [vmem:[%s2 + $0x58] sm:$0xff]
  %v54 = vld [vmem:[%s2 + $0x60] sm:$0xff]
  %v55 = vld [vmem:[%s2 + $0x68] sm:$0xff]
  %v56 = vld [vmem:[%s2 + $0x70] sm:$0xff]
  %v57 = vld [vmem:[%s2 + $0x78] sm:$0xff]
  %v58 = vld [vmem:[%s2 + $0x80] sm:$0xff]
  %v59 = vld [vmem:[%s2 + $0x88] sm:$0xff]
  %v60 = vld [vmem:[%s2 + $0x90] sm:$0xff]
  %v61 = vld [vmem:[%s2 + $0x98] sm:$0xff]
  %v62 = vld [vmem:[%s2 + $0xa0] sm:$0xff]
  %v63 = vld [vmem:[%s2 + $0xa8] sm:$0xff]
  %v64 = vld [vmem:[%s2 + $0xb0] sm:$0xff]
  %v65 = vld [vmem:[%s2 + $0xb8] sm:$0xff]
  %v66 = vld [vmem:[%s8] sm:$0x1]
  %v68 = vperm.slane %v66, 0
  %vm70 = vcmask 523264
  %v72 = vsel %vm70, %v35, 0
  %v75 = vsel %vm70, %v37, 0
  %v78 = vsel %vm70, %v39, 0
  %v81 = vsel %vm70, %v41, 0
  %83 = vmatpush.msra.mxu0 %v57
  %84 = vmatpush.msra.mxu0 %v56
  %85 = vmatpush.msra.mxu0 %v55
  %86 = vmatpush.msra.mxu0 %v54
  %87 = vmatpush.msra.mxu0 %v53
  %88 = vmatpush.msra.mxu0 %v52
  %89 = vmatpush.msra.mxu0 %v51
  %90 = vmatpush.msra.mxu0 %v50
  %91 = vmatpush.msra.mxu0 %v49
  %92 = vmatpush.msra.mxu0 %v48
  %93 = vmatpush.msra.mxu0 %v47
  %94 = vmatpush.msra.mxu0 %v46
  %95 = vmatpush.msra.mxu0 %v45
  %96 = vmatpush.msra.mxu0 %v44
  %97 = vmatpush.msra.mxu0 %v43
  %98 = vmatpush.msra.mxu0 %v42
  %99 = vmatmul.f32.gmra.mxu0 %v34
  %v100 = vpop.f32.mrf.mxu0
  %v101 = vadd.f32 %v68, %v100
  %102 = vmatmul.f32.gmra.mxu0 %v36
  %v103 = vpop.f32.mrf.mxu0
  %v104 = vadd.f32 %v68, %v103
  %105 = vmatmul.f32.gmra.mxu0 %v38
  %v106 = vpop.f32.mrf.mxu0
  %v107 = vadd.f32 %v68, %v106
  %108 = vmatmul.f32.gmra.mxu0 %v40
  %v109 = vpop.f32.mrf.mxu0
  %v110 = vadd.f32 %v68, %v109
  %111 = vdwg.mxu0
  %112 = vmatpush.msra.mxu0 0.0
  %113 = vmatpush.msra.mxu0 0.0
  %114 = vmatpush.msra.mxu0 0.0
  %115 = vmatpush.msra.mxu0 0.0
  %116 = vmatpush.msra.mxu0 0.0
  %117 = vmatpush.msra.mxu0 0.0
  %118 = vmatpush.msra.mxu0 0.0
  %119 = vmatpush.msra.mxu0 0.0
  %120 = vmatpush.msra.mxu0 %v65
  %121 = vmatpush.msra.mxu0 %v64
  %122 = vmatpush.msra.mxu0 %v63
  %123 = vmatpush.msra.mxu0 %v62
  %124 = vmatpush.msra.mxu0 %v61
  %125 = vmatpush.msra.mxu0 %v60
  %126 = vmatpush.msra.mxu0 %v59
  %127 = vmatpush.msra.mxu0 %v58
  %128 = vmatmul.f32.gmra.mxu0 %v72
  %v129 = vpop.f32.mrf.mxu0
  %v130 = vadd.f32 %v101, %v129
  %131 = vmatmul.f32.gmra.mxu0 %v75
  %v132 = vpop.f32.mrf.mxu0
  %v133 = vadd.f32 %v104, %v132
  %134 = vmatmul.f32.gmra.mxu0 %v78
  %v135 = vpop.f32.mrf.mxu0
  %v136 = vadd.f32 %v107, %v135
  %137 = vmatmul.f32.gmra.mxu0 %v81
  %v138 = vpop.f32.mrf.mxu0
  %v139 = vadd.f32 %v110, %v138
  %140 = vdwg.mxu0
  %v141 = vmax.f32 %v130, 0.0
  %v142 = vmax.f32 %v133, 0.0
  %v143 = vmax.f32 %v136, 0.0
  %v144 = vmax.f32 %v139, 0.0
  %v146 = vrot.slane %v141, 2
  %v148 = vrot.slane %v141, 4
  %v150 = vrot.slane %v141, 6
  %v153 = vrot.slane %v142, 2
  %v155 = vrot.slane %v142, 4
  %v157 = vrot.slane %v142, 6
  %v160 = vrot.slane %v143, 2
  %v162 = vrot.slane %v143, 4
  %v164 = vrot.slane %v143, 6
  %v167 = vrot.slane %v144, 2
  %v169 = vrot.slane %v144, 4
  %v171 = vrot.slane %v144, 6
  %v173 = vld [vmem:[%s3] sm:$0xff]
  %v174 = vld [vmem:[%s3 + $0x8] sm:$0xff]
  %v175 = vld [vmem:[%s3 + $0x10] sm:$0xff]
  %v176 = vld [vmem:[%s3 + $0x18] sm:$0xff]
  %v177 = vld [vmem:[%s3 + $0x20] sm:$0xff]
  %v178 = vld [vmem:[%s3 + $0x28] sm:$0xff]
  %v179 = vld [vmem:[%s3 + $0x30] sm:$0xff]
  %v180 = vld [vmem:[%s3 + $0x38] sm:$0xff]
  %v181 = vld [vmem:[%s3 + $0x40] sm:$0xff]
  %v182 = vld [vmem:[%s3 + $0x48] sm:$0xff]
  %v183 = vld [vmem:[%s3 + $0x50] sm:$0xff]
  %v184 = vld [vmem:[%s3 + $0x58] sm:$0xff]
  %v185 = vld [vmem:[%s3 + $0x60] sm:$0xff]
  %v186 = vld [vmem:[%s3 + $0x68] sm:$0xff]
  %v187 = vld [vmem:[%s3 + $0x70] sm:$0xff]
  %v188 = vld [vmem:[%s3 + $0x78] sm:$0xff]
  %v189 = vld [vmem:[%s3 + $0x80] sm:$0xff]
  %v190 = vld [vmem:[%s3 + $0x88] sm:$0xff]
  %v191 = vld [vmem:[%s3 + $0x90] sm:$0xff]
  %v192 = vld [vmem:[%s3 + $0x98] sm:$0xff]
  %v193 = vld [vmem:[%s3 + $0xa0] sm:$0xff]
  %v194 = vld [vmem:[%s3 + $0xa8] sm:$0xff]
  %v195 = vld [vmem:[%s3 + $0xb0] sm:$0xff]
  %v196 = vld [vmem:[%s3 + $0xb8] sm:$0xff]
  %v197 = vld [vmem:[%s3 + $0xc0] sm:$0xff]
  %v198 = vld [vmem:[%s3 + $0xc8] sm:$0xff]
  %v199 = vld [vmem:[%s3 + $0xd0] sm:$0xff]
  %v200 = vld [vmem:[%s3 + $0xd8] sm:$0xff]
  %v201 = vld [vmem:[%s3 + $0xe0] sm:$0xff]
  %v202 = vld [vmem:[%s3 + $0xe8] sm:$0xff]
  %v203 = vld [vmem:[%s3 + $0xf0] sm:$0xff]
  %v204 = vld [vmem:[%s3 + $0xf8] sm:$0xff]
  %v205 = vunpack.c.l.bf16 %v173
  %v206 = vunpack.c.h.bf16 %v173
  %v207 = vunpack.c.l.bf16 %v174
  %v208 = vunpack.c.h.bf16 %v174
  %v209 = vunpack.c.l.bf16 %v175
  %v210 = vunpack.c.h.bf16 %v175
  %v211 = vunpack.c.l.bf16 %v176
  %v212 = vunpack.c.h.bf16 %v176
  %v213 = vunpack.c.l.bf16 %v177
  %v214 = vunpack.c.h.bf16 %v177
  %v215 = vunpack.c.l.bf16 %v178
  %v216 = vunpack.c.h.bf16 %v178
  %v217 = vunpack.c.l.bf16 %v179
  %v218 = vunpack.c.h.bf16 %v179
  %v219 = vunpack.c.l.bf16 %v180
  %v220 = vunpack.c.h.bf16 %v180
  %v221 = vunpack.c.l.bf16 %v181
  %v222 = vunpack.c.h.bf16 %v181
  %v223 = vunpack.c.l.bf16 %v182
  %v224 = vunpack.c.h.bf16 %v182
  %v225 = vunpack.c.l.bf16 %v183
  %v226 = vunpack.c.h.bf16 %v183
  %v227 = vunpack.c.l.bf16 %v184
  %v228 = vunpack.c.h.bf16 %v184
  %v229 = vunpack.c.l.bf16 %v185
  %v230 = vunpack.c.h.bf16 %v185
  %v231 = vunpack.c.l.bf16 %v186
  %v232 = vunpack.c.h.bf16 %v186
  %v233 = vunpack.c.l.bf16 %v187
  %v234 = vunpack.c.h.bf16 %v187
  %v235 = vunpack.c.l.bf16 %v188
  %v236 = vunpack.c.h.bf16 %v188
  %v237 = vunpack.c.l.bf16 %v189
  %v238 = vunpack.c.h.bf16 %v189
  %v239 = vunpack.c.l.bf16 %v190
  %v240 = vunpack.c.h.bf16 %v190
  %v241 = vunpack.c.l.bf16 %v191
  %v242 = vunpack.c.h.bf16 %v191
  %v243 = vunpack.c.l.bf16 %v192
  %v244 = vunpack.c.h.bf16 %v192
  %v245 = vunpack.c.l.bf16 %v193
  %v246 = vunpack.c.h.bf16 %v193
  %v247 = vunpack.c.l.bf16 %v194
  %v248 = vunpack.c.h.bf16 %v194
  %v249 = vunpack.c.l.bf16 %v195
  %v250 = vunpack.c.h.bf16 %v195
  %v251 = vunpack.c.l.bf16 %v196
  %v252 = vunpack.c.h.bf16 %v196
  %v253 = vunpack.c.l.bf16 %v197
  %v254 = vunpack.c.h.bf16 %v197
  %v255 = vunpack.c.l.bf16 %v198
  %v256 = vunpack.c.h.bf16 %v198
  %v257 = vunpack.c.l.bf16 %v199
  %v258 = vunpack.c.h.bf16 %v199
  %v259 = vunpack.c.l.bf16 %v200
  %v260 = vunpack.c.h.bf16 %v200
  %v261 = vunpack.c.l.bf16 %v201
  %v262 = vunpack.c.h.bf16 %v201
  %v263 = vunpack.c.l.bf16 %v202
  %v264 = vunpack.c.h.bf16 %v202
  %v265 = vunpack.c.l.bf16 %v203
  %v266 = vunpack.c.h.bf16 %v203
  %v267 = vunpack.c.l.bf16 %v204
  %v268 = vunpack.c.h.bf16 %v204
  %v269 = vld [vmem:[%s8 + $0x1] sm:$0x1]
  %v271 = vperm.slane %v269, 0
  %273 = vmatpush.xpose.msra.mxu0 0.0
  %274 = vmatpush.xpose.msra.mxu0 0.0
  %275 = vmatpush.xpose.msra.mxu0 0.0
  %276 = vmatpush.xpose.msra.mxu0 0.0
  %277 = vmatpush.xpose.msra.mxu0 0.0
  %278 = vmatpush.xpose.msra.mxu0 0.0
  %279 = vmatpush.xpose.msra.mxu0 0.0
  %280 = vmatpush.xpose.msra.mxu0 0.0
  %281 = vmatpush.xpose.msra.mxu0 0.0
  %282 = vmatpush.xpose.msra.mxu0 0.0
  %283 = vmatpush.xpose.msra.mxu0 0.0
  %284 = vmatpush.xpose.msra.mxu0 0.0
  %285 = vmatpush.xpose.msra.mxu0 %v253
  %286 = vmatpush.xpose.msra.mxu0 %v237
  %287 = vmatpush.xpose.msra.mxu0 %v221
  %288 = vmatpush.xpose.msra.mxu0 %v205
  %289 = vmatmul.f32.gmra.mxu0 %v141
  %v290 = vpop.f32.mrf.mxu0
  %v291 = vadd.f32 %v271, %v290
  %292 = vdwg.mxu0
  %293 = vmatpush.xpose.msra.mxu0 0.0
  %294 = vmatpush.xpose.msra.mxu0 0.0
  %295 = vmatpush.xpose.msra.mxu0 0.0
  %296 = vmatpush.xpose.msra.mxu0 0.0
  %297 = vmatpush.xpose.msra.mxu0 0.0
  %298 = vmatpush.xpose.msra.mxu0 0.0
  %299 = vmatpush.xpose.msra.mxu0 0.0
  %300 = vmatpush.xpose.msra.mxu0 0.0
  %301 = vmatpush.xpose.msra.mxu0 0.0
  %302 = vmatpush.xpose.msra.mxu0 0.0
  %303 = vmatpush.xpose.msra.mxu0 0.0
  %304 = vmatpush.xpose.msra.mxu0 0.0
  %305 = vmatpush.xpose.msra.mxu0 %v254
  %306 = vmatpush.xpose.msra.mxu0 %v238
  %307 = vmatpush.xpose.msra.mxu0 %v222
  %308 = vmatpush.xpose.msra.mxu0 %v206
  %309 = vmatmul.f32.gmra.mxu0 %v146
  %v310 = vpop.f32.mrf.mxu0
  %v311 = vadd.f32 %v291, %v310
  %312 = vdwg.mxu0
  %313 = vmatpush.xpose.msra.mxu0 0.0
  %314 = vmatpush.xpose.msra.mxu0 0.0
  %315 = vmatpush.xpose.msra.mxu0 0.0
  %316 = vmatpush.xpose.msra.mxu0 0.0
  %317 = vmatpush.xpose.msra.mxu0 0.0
  %318 = vmatpush.xpose.msra.mxu0 0.0
  %319 = vmatpush.xpose.msra.mxu0 0.0
  %320 = vmatpush.xpose.msra.mxu0 0.0
  %321 = vmatpush.xpose.msra.mxu0 0.0
  %322 = vmatpush.xpose.msra.mxu0 0.0
  %323 = vmatpush.xpose.msra.mxu0 0.0
  %324 = vmatpush.xpose.msra.mxu0 0.0
  %325 = vmatpush.xpose.msra.mxu0 %v255
  %326 = vmatpush.xpose.msra.mxu0 %v239
  %327 = vmatpush.xpose.msra.mxu0 %v223
  %328 = vmatpush.xpose.msra.mxu0 %v207
  %329 = vmatmul.f32.gmra.mxu0 %v148
  %v330 = vpop.f32.mrf.mxu0
  %v331 = vadd.f32 %v311, %v330
  %332 = vdwg.mxu0
  %333 = vmatpush.xpose.msra.mxu0 0.0
  %334 = vmatpush.xpose.msra.mxu0 0.0
  %335 = vmatpush.xpose.msra.mxu0 0.0
  %336 = vmatpush.xpose.msra.mxu0 0.0
  %337 = vmatpush.xpose.msra.mxu0 0.0
  %338 = vmatpush.xpose.msra.mxu0 0.0
  %339 = vmatpush.xpose.msra.mxu0 0.0
  %340 = vmatpush.xpose.msra.mxu0 0.0
  %341 = vmatpush.xpose.msra.mxu0 0.0
  %342 = vmatpush.xpose.msra.mxu0 0.0
  %343 = vmatpush.xpose.msra.mxu0 0.0
  %344 = vmatpush.xpose.msra.mxu0 0.0
  %345 = vmatpush.xpose.msra.mxu0 %v256
  %346 = vmatpush.xpose.msra.mxu0 %v240
  %347 = vmatpush.xpose.msra.mxu0 %v224
  %348 = vmatpush.xpose.msra.mxu0 %v208
  %349 = vmatmul.f32.gmra.mxu0 %v150
  %v350 = vpop.f32.mrf.mxu0
  %v351 = vadd.f32 %v331, %v350
  %352 = vdwg.mxu0
  %353 = vmatpush.xpose.msra.mxu0 0.0
  %354 = vmatpush.xpose.msra.mxu0 0.0
  %355 = vmatpush.xpose.msra.mxu0 0.0
  %356 = vmatpush.xpose.msra.mxu0 0.0
  %357 = vmatpush.xpose.msra.mxu0 0.0
  %358 = vmatpush.xpose.msra.mxu0 0.0
  %359 = vmatpush.xpose.msra.mxu0 0.0
  %360 = vmatpush.xpose.msra.mxu0 0.0
  %361 = vmatpush.xpose.msra.mxu0 0.0
  %362 = vmatpush.xpose.msra.mxu0 0.0
  %363 = vmatpush.xpose.msra.mxu0 0.0
  %364 = vmatpush.xpose.msra.mxu0 0.0
  %365 = vmatpush.xpose.msra.mxu0 %v257
  %366 = vmatpush.xpose.msra.mxu0 %v241
  %367 = vmatpush.xpose.msra.mxu0 %v225
  %368 = vmatpush.xpose.msra.mxu0 %v209
  %369 = vmatmul.f32.gmra.mxu0 %v142
  %v370 = vpop.f32.mrf.mxu0
  %v371 = vadd.f32 %v351, %v370
  %372 = vdwg.mxu0
  %373 = vmatpush.xpose.msra.mxu0 0.0
  %374 = vmatpush.xpose.msra.mxu0 0.0
  %375 = vmatpush.xpose.msra.mxu0 0.0
  %376 = vmatpush.xpose.msra.mxu0 0.0
  %377 = vmatpush.xpose.msra.mxu0 0.0
  %378 = vmatpush.xpose.msra.mxu0 0.0
  %379 = vmatpush.xpose.msra.mxu0 0.0
  %380 = vmatpush.xpose.msra.mxu0 0.0
  %381 = vmatpush.xpose.msra.mxu0 0.0
  %382 = vmatpush.xpose.msra.mxu0 0.0
  %383 = vmatpush.xpose.msra.mxu0 0.0
  %384 = vmatpush.xpose.msra.mxu0 0.0
  %385 = vmatpush.xpose.msra.mxu0 %v258
  %386 = vmatpush.xpose.msra.mxu0 %v242
  %387 = vmatpush.xpose.msra.mxu0 %v226
  %388 = vmatpush.xpose.msra.mxu0 %v210
  %389 = vmatmul.f32.gmra.mxu0 %v153
  %v390 = vpop.f32.mrf.mxu0
  %v391 = vadd.f32 %v371, %v390
  %392 = vdwg.mxu0
  %393 = vmatpush.xpose.msra.mxu0 0.0
  %394 = vmatpush.xpose.msra.mxu0 0.0
  %395 = vmatpush.xpose.msra.mxu0 0.0
  %396 = vmatpush.xpose.msra.mxu0 0.0
  %397 = vmatpush.xpose.msra.mxu0 0.0
  %398 = vmatpush.xpose.msra.mxu0 0.0
  %399 = vmatpush.xpose.msra.mxu0 0.0
  %400 = vmatpush.xpose.msra.mxu0 0.0
  %401 = vmatpush.xpose.msra.mxu0 0.0
  %402 = vmatpush.xpose.msra.mxu0 0.0
  %403 = vmatpush.xpose.msra.mxu0 0.0
  %404 = vmatpush.xpose.msra.mxu0 0.0
  %405 = vmatpush.xpose.msra.mxu0 %v259
  %406 = vmatpush.xpose.msra.mxu0 %v243
  %407 = vmatpush.xpose.msra.mxu0 %v227
  %408 = vmatpush.xpose.msra.mxu0 %v211
  %409 = vmatmul.f32.gmra.mxu0 %v155
  %v410 = vpop.f32.mrf.mxu0
  %v411 = vadd.f32 %v391, %v410
  %412 = vdwg.mxu0
  %413 = vmatpush.xpose.msra.mxu0 0.0
  %414 = vmatpush.xpose.msra.mxu0 0.0
  %415 = vmatpush.xpose.msra.mxu0 0.0
  %416 = vmatpush.xpose.msra.mxu0 0.0
  %417 = vmatpush.xpose.msra.mxu0 0.0
  %418 = vmatpush.xpose.msra.mxu0 0.0
  %419 = vmatpush.xpose.msra.mxu0 0.0
  %420 = vmatpush.xpose.msra.mxu0 0.0
  %421 = vmatpush.xpose.msra.mxu0 0.0
  %422 = vmatpush.xpose.msra.mxu0 0.0
  %423 = vmatpush.xpose.msra.mxu0 0.0
  %424 = vmatpush.xpose.msra.mxu0 0.0
  %425 = vmatpush.xpose.msra.mxu0 %v260
  %426 = vmatpush.xpose.msra.mxu0 %v244
  %427 = vmatpush.xpose.msra.mxu0 %v228
  %428 = vmatpush.xpose.msra.mxu0 %v212
  %429 = vmatmul.f32.gmra.mxu0 %v157
  %v430 = vpop.f32.mrf.mxu0
  %v431 = vadd.f32 %v411, %v430
  %432 = vdwg.mxu0
  %433 = vmatpush.xpose.msra.mxu0 0.0
  %434 = vmatpush.xpose.msra.mxu0 0.0
  %435 = vmatpush.xpose.msra.mxu0 0.0
  %436 = vmatpush.xpose.msra.mxu0 0.0
  %437 = vmatpush.xpose.msra.mxu0 0.0
  %438 = vmatpush.xpose.msra.mxu0 0.0
  %439 = vmatpush.xpose.msra.mxu0 0.0
  %440 = vmatpush.xpose.msra.mxu0 0.0
  %441 = vmatpush.xpose.msra.mxu0 0.0
  %442 = vmatpush.xpose.msra.mxu0 0.0
  %443 = vmatpush.xpose.msra.mxu0 0.0
  %444 = vmatpush.xpose.msra.mxu0 0.0
  %445 = vmatpush.xpose.msra.mxu0 %v261
  %446 = vmatpush.xpose.msra.mxu0 %v245
  %447 = vmatpush.xpose.msra.mxu0 %v229
  %448 = vmatpush.xpose.msra.mxu0 %v213
  %449 = vmatmul.f32.gmra.mxu0 %v143
  %v450 = vpop.f32.mrf.mxu0
  %v451 = vadd.f32 %v431, %v450
  %452 = vdwg.mxu0
  %453 = vmatpush.xpose.msra.mxu0 0.0
  %454 = vmatpush.xpose.msra.mxu0 0.0
  %455 = vmatpush.xpose.msra.mxu0 0.0
  %456 = vmatpush.xpose.msra.mxu0 0.0
  %457 = vmatpush.xpose.msra.mxu0 0.0
  %458 = vmatpush.xpose.msra.mxu0 0.0
  %459 = vmatpush.xpose.msra.mxu0 0.0
  %460 = vmatpush.xpose.msra.mxu0 0.0
  %461 = vmatpush.xpose.msra.mxu0 0.0
  %462 = vmatpush.xpose.msra.mxu0 0.0
  %463 = vmatpush.xpose.msra.mxu0 0.0
  %464 = vmatpush.xpose.msra.mxu0 0.0
  %465 = vmatpush.xpose.msra.mxu0 %v262
  %466 = vmatpush.xpose.msra.mxu0 %v246
  %467 = vmatpush.xpose.msra.mxu0 %v230
  %468 = vmatpush.xpose.msra.mxu0 %v214
  %469 = vmatmul.f32.gmra.mxu0 %v160
  %v470 = vpop.f32.mrf.mxu0
  %v471 = vadd.f32 %v451, %v470
  %472 = vdwg.mxu0
  %473 = vmatpush.xpose.msra.mxu0 0.0
  %474 = vmatpush.xpose.msra.mxu0 0.0
  %475 = vmatpush.xpose.msra.mxu0 0.0
  %476 = vmatpush.xpose.msra.mxu0 0.0
  %477 = vmatpush.xpose.msra.mxu0 0.0
  %478 = vmatpush.xpose.msra.mxu0 0.0
  %479 = vmatpush.xpose.msra.mxu0 0.0
  %480 = vmatpush.xpose.msra.mxu0 0.0
  %481 = vmatpush.xpose.msra.mxu0 0.0
  %482 = vmatpush.xpose.msra.mxu0 0.0
  %483 = vmatpush.xpose.msra.mxu0 0.0
  %484 = vmatpush.xpose.msra.mxu0 0.0
  %485 = vmatpush.xpose.msra.mxu0 %v263
  %486 = vmatpush.xpose.msra.mxu0 %v247
  %487 = vmatpush.xpose.msra.mxu0 %v231
  %488 = vmatpush.xpose.msra.mxu0 %v215
  %489 = vmatmul.f32.gmra.mxu0 %v162
  %v490 = vpop.f32.mrf.mxu0
  %v491 = vadd.f32 %v471, %v490
  %492 = vdwg.mxu0
  %493 = vmatpush.xpose.msra.mxu0 0.0
  %494 = vmatpush.xpose.msra.mxu0 0.0
  %495 = vmatpush.xpose.msra.mxu0 0.0
  %496 = vmatpush.xpose.msra.mxu0 0.0
  %497 = vmatpush.xpose.msra.mxu0 0.0
  %498 = vmatpush.xpose.msra.mxu0 0.0
  %499 = vmatpush.xpose.msra.mxu0 0.0
  %500 = vmatpush.xpose.msra.mxu0 0.0
  %501 = vmatpush.xpose.msra.mxu0 0.0
  %502 = vmatpush.xpose.msra.mxu0 0.0
  %503 = vmatpush.xpose.msra.mxu0 0.0
  %504 = vmatpush.xpose.msra.mxu0 0.0
  %505 = vmatpush.xpose.msra.mxu0 %v264
  %506 = vmatpush.xpose.msra.mxu0 %v248
  %507 = vmatpush.xpose.msra.mxu0 %v232
  %508 = vmatpush.xpose.msra.mxu0 %v216
  %509 = vmatmul.f32.gmra.mxu0 %v164
  %v510 = vpop.f32.mrf.mxu0
  %v511 = vadd.f32 %v491, %v510
  %512 = vdwg.mxu0
  %513 = vmatpush.xpose.msra.mxu0 0.0
  %514 = vmatpush.xpose.msra.mxu0 0.0
  %515 = vmatpush.xpose.msra.mxu0 0.0
  %516 = vmatpush.xpose.msra.mxu0 0.0
  %517 = vmatpush.xpose.msra.mxu0 0.0
  %518 = vmatpush.xpose.msra.mxu0 0.0
  %519 = vmatpush.xpose.msra.mxu0 0.0
  %520 = vmatpush.xpose.msra.mxu0 0.0
  %521 = vmatpush.xpose.msra.mxu0 0.0
  %522 = vmatpush.xpose.msra.mxu0 0.0
  %523 = vmatpush.xpose.msra.mxu0 0.0
  %524 = vmatpush.xpose.msra.mxu0 0.0
  %525 = vmatpush.xpose.msra.mxu0 %v265
  %526 = vmatpush.xpose.msra.mxu0 %v249
  %527 = vmatpush.xpose.msra.mxu0 %v233
  %528 = vmatpush.xpose.msra.mxu0 %v217
  %529 = vmatmul.f32.gmra.mxu0 %v144
  %v530 = vpop.f32.mrf.mxu0
  %v531 = vadd.f32 %v511, %v530
  %532 = vdwg.mxu0
  %533 = vmatpush.xpose.msra.mxu0 0.0
  %534 = vmatpush.xpose.msra.mxu0 0.0
  %535 = vmatpush.xpose.msra.mxu0 0.0
  %536 = vmatpush.xpose.msra.mxu0 0.0
  %537 = vmatpush.xpose.msra.mxu0 0.0
  %538 = vmatpush.xpose.msra.mxu0 0.0
  %539 = vmatpush.xpose.msra.mxu0 0.0
  %540 = vmatpush.xpose.msra.mxu0 0.0
  %541 = vmatpush.xpose.msra.mxu0 0.0
  %542 = vmatpush.xpose.msra.mxu0 0.0
  %543 = vmatpush.xpose.msra.mxu0 0.0
  %544 = vmatpush.xpose.msra.mxu0 0.0
  %545 = vmatpush.xpose.msra.mxu0 %v266
  %546 = vmatpush.xpose.msra.mxu0 %v250
  %547 = vmatpush.xpose.msra.mxu0 %v234
  %548 = vmatpush.xpose.msra.mxu0 %v218
  %549 = vmatmul.f32.gmra.mxu0 %v167
  %v550 = vpop.f32.mrf.mxu0
  %v551 = vadd.f32 %v531, %v550
  %552 = vdwg.mxu0
  %553 = vmatpush.xpose.msra.mxu0 0.0
  %554 = vmatpush.xpose.msra.mxu0 0.0
  %555 = vmatpush.xpose.msra.mxu0 0.0
  %556 = vmatpush.xpose.msra.mxu0 0.0
  %557 = vmatpush.xpose.msra.mxu0 0.0
  %558 = vmatpush.xpose.msra.mxu0 0.0
  %559 = vmatpush.xpose.msra.mxu0 0.0
  %560 = vmatpush.xpose.msra.mxu0 0.0
  %561 = vmatpush.xpose.msra.mxu0 0.0
  %562 = vmatpush.xpose.msra.mxu0 0.0
  %563 = vmatpush.xpose.msra.mxu0 0.0
  %564 = vmatpush.xpose.msra.mxu0 0.0
  %565 = vmatpush.xpose.msra.mxu0 %v267
  %566 = vmatpush.xpose.msra.mxu0 %v251
  %567 = vmatpush.xpose.msra.mxu0 %v235
  %568 = vmatpush.xpose.msra.mxu0 %v219
  %569 = vmatmul.f32.gmra.mxu0 %v169
  %v570 = vpop.f32.mrf.mxu0
  %v571 = vadd.f32 %v551, %v570
  %572 = vdwg.mxu0
  %573 = vmatpush.xpose.msra.mxu0 0.0
  %574 = vmatpush.xpose.msra.mxu0 0.0
  %575 = vmatpush.xpose.msra.mxu0 0.0
  %576 = vmatpush.xpose.msra.mxu0 0.0
  %577 = vmatpush.xpose.msra.mxu0 0.0
  %578 = vmatpush.xpose.msra.mxu0 0.0
  %579 = vmatpush.xpose.msra.mxu0 0.0
  %580 = vmatpush.xpose.msra.mxu0 0.0
  %581 = vmatpush.xpose.msra.mxu0 0.0
  %582 = vmatpush.xpose.msra.mxu0 0.0
  %583 = vmatpush.xpose.msra.mxu0 0.0
  %584 = vmatpush.xpose.msra.mxu0 0.0
  %585 = vmatpush.xpose.msra.mxu0 %v268
  %586 = vmatpush.xpose.msra.mxu0 %v252
  %587 = vmatpush.xpose.msra.mxu0 %v236
  %588 = vmatpush.xpose.msra.mxu0 %v220
  %589 = vmatmul.f32.gmra.mxu0 %v171
  %v590 = vpop.f32.mrf.mxu0
  %v591 = vadd.f32 %v571, %v590
  %592 = vdwg.mxu0
  %v593 = vld [vmem:[%s4] sm:$0xff]
  %v594 = vld [vmem:[%s4 + $0x8] sm:$0xff]
  %v595 = vld [vmem:[%s4 + $0x10] sm:$0xff]
  %v596 = vld [vmem:[%s4 + $0x18] sm:$0xff]
  %v597 = vld [vmem:[%s8 + $0x2] sm:$0x1]
  %v599 = vperm.slane %v597, 0
  %vm601 = vcmask 261120
  %v603 = vsel %vm601, %v591, 0
  %605 = vmatpush.msra.mxu0 0.0
  %606 = vmatpush.msra.mxu0 0.0
  %607 = vmatpush.msra.mxu0 0.0
  %608 = vmatpush.msra.mxu0 0.0
  %609 = vmatpush.msra.mxu0 0.0
  %610 = vmatpush.msra.mxu0 0.0
  %611 = vmatpush.msra.mxu0 0.0
  %612 = vmatpush.msra.mxu0 0.0
  %613 = vmatpush.msra.mxu0 0.0
  %614 = vmatpush.msra.mxu0 0.0
  %615 = vmatpush.msra.mxu0 0.0
  %616 = vmatpush.msra.mxu0 0.0
  %617 = vmatpush.msra.mxu0 %v596
  %618 = vmatpush.msra.mxu0 %v595
  %619 = vmatpush.msra.mxu0 %v594
  %620 = vmatpush.msra.mxu0 %v593
  %621 = vmatmul.f32.gmra.mxu0 %v603
  %v622 = vpop.f32.mrf.mxu0
  %v623 = vadd.f32 %v599, %v622
  %624 = vdwg.mxu0
  %v625 = vld [vmem:[%s1] sm:$0x3]
  %v626 = vadd.f32 %v623, %v625
  %v627 = vld [vmem:[%s5] sm:$0xff]
  %v628 = vld [vmem:[%s5 + $0x8] sm:$0xff]
  %v629 = vld [vmem:[%s8 + $0x3] sm:$0x1]
  %v631 = vperm.slane %v629, 0
  %vm633 = vcmask 130048
  %v635 = vsel %vm633, %v626, 0
  %637 = vmatpush.msra.mxu0 0.0
  %638 = vmatpush.msra.mxu0 0.0
  %639 = vmatpush.msra.mxu0 0.0
  %640 = vmatpush.msra.mxu0 0.0
  %641 = vmatpush.msra.mxu0 0.0
  %642 = vmatpush.msra.mxu0 0.0
  %643 = vmatpush.msra.mxu0 0.0
  %644 = vmatpush.msra.mxu0 0.0
  %645 = vmatpush.msra.mxu0 0.0
  %646 = vmatpush.msra.mxu0 0.0
  %647 = vmatpush.msra.mxu0 0.0
  %648 = vmatpush.msra.mxu0 0.0
  %649 = vmatpush.msra.mxu0 0.0
  %650 = vmatpush.msra.mxu0 0.0
  %651 = vmatpush.msra.mxu0 %v628
  %652 = vmatpush.msra.mxu0 %v627
  %653 = vmatmul.f32.gmra.mxu0 %v635
  %v654 = vpop.f32.mrf.mxu0
  %v655 = vadd.f32 %v631, %v654
  %656 = vdwg.mxu0
  %657 = vst [vmem:[%s9] sm:$0x3] 0.0
  %vm658 = vcmask 123904
  %659 = vst.msk [vmem:[%s9] sm:$0x3] %vm658, %v623
  %660 = vrot.lane.b32.xlu0 %v626, 16
  %v661 = vpop.permute.xlu0 %660
  %vm663 = vcmask 255104
  %664 = vst.msk [vmem:[%s9] sm:$0x3] %vm663, %v661
  %665 = vrot.lane.b32.xlu0 %v591, 32
  %v666 = vpop.permute.xlu0 %665
  %vm668 = vcmask 517376
  %669 = vst.msk [vmem:[%s9] sm:$0x3] %vm668, %v666
  %671 = vrot.lane.b32.xlu0 %v655, 64
  %v672 = vpop.permute.xlu0 %671
  %vm674 = vcmask 779776
  %675 = vst.msk [vmem:[%s9] sm:$0x3] %vm674, %v672
  %v676 = vld [vmem:[%s6] sm:$0xff]
  %v677 = vld [vmem:[%s6 + $0x8] sm:$0xff]
  %v678 = vld [vmem:[%s6 + $0x10] sm:$0xff]
  %v679 = vld [vmem:[%s6 + $0x18] sm:$0xff]
  %v680 = vld [vmem:[%s6 + $0x20] sm:$0xff]
  %v681 = vld [vmem:[%s6 + $0x28] sm:$0xff]
  %v682 = vld [vmem:[%s6 + $0x30] sm:$0xff]
  %v683 = vld [vmem:[%s6 + $0x38] sm:$0xff]
  %v684 = vld [vmem:[%s6 + $0x40] sm:$0xff]
  %v685 = vld [vmem:[%s6 + $0x48] sm:$0xff]
  %v686 = vld [vmem:[%s6 + $0x50] sm:$0xff]
  %v687 = vld [vmem:[%s6 + $0x58] sm:$0xff]
  %v688 = vld [vmem:[%s6 + $0x60] sm:$0xff]
  %v689 = vld [vmem:[%s6 + $0x68] sm:$0xff]
  %v690 = vld [vmem:[%s6 + $0x70] sm:$0xff]
  %v691 = vld [vmem:[%s6 + $0x78] sm:$0xff]
  %v692 = vld [vmem:[%s6 + $0x80] sm:$0xff]
  %v693 = vld [vmem:[%s6 + $0x88] sm:$0xff]
  %v694 = vld [vmem:[%s6 + $0x90] sm:$0xff]
  %v695 = vld [vmem:[%s6 + $0x98] sm:$0xff]
  %v696 = vld [vmem:[%s6 + $0xa0] sm:$0xff]
  %v697 = vld [vmem:[%s6 + $0xa8] sm:$0xff]
  %v698 = vld [vmem:[%s6 + $0xb0] sm:$0xff]
  %v699 = vld [vmem:[%s6 + $0xb8] sm:$0xff]
  %v700 = vld [vmem:[%s6 + $0xc0] sm:$0xff]
  %v701 = vld [vmem:[%s6 + $0xc8] sm:$0xff]
  %v702 = vld [vmem:[%s6 + $0xd0] sm:$0xff]
  %v703 = vld [vmem:[%s6 + $0xd8] sm:$0xff]
  %v704 = vld [vmem:[%s6 + $0xe0] sm:$0xff]
  %v705 = vld [vmem:[%s6 + $0xe8] sm:$0xff]
  %v706 = vld [vmem:[%s6 + $0xf0] sm:$0xff]
  %v707 = vld [vmem:[%s6 + $0xf8] sm:$0xff]
  %v708 = vunpack.c.l.bf16 %v676
  %v709 = vunpack.c.h.bf16 %v676
  %v710 = vunpack.c.l.bf16 %v677
  %v711 = vunpack.c.h.bf16 %v677
  %v712 = vunpack.c.l.bf16 %v678
  %v713 = vunpack.c.h.bf16 %v678
  %v714 = vunpack.c.l.bf16 %v679
  %v715 = vunpack.c.h.bf16 %v679
  %v716 = vunpack.c.l.bf16 %v680
  %v717 = vunpack.c.h.bf16 %v680
  %v718 = vunpack.c.l.bf16 %v681
  %v719 = vunpack.c.h.bf16 %v681
  %v720 = vunpack.c.l.bf16 %v682
  %v721 = vunpack.c.h.bf16 %v682
  %v722 = vunpack.c.l.bf16 %v683
  %v723 = vunpack.c.h.bf16 %v683
  %v724 = vunpack.c.l.bf16 %v684
  %v725 = vunpack.c.h.bf16 %v684
  %v726 = vunpack.c.l.bf16 %v685
  %v727 = vunpack.c.h.bf16 %v685
  %v728 = vunpack.c.l.bf16 %v686
  %v729 = vunpack.c.h.bf16 %v686
  %v730 = vunpack.c.l.bf16 %v687
  %v731 = vunpack.c.h.bf16 %v687
  %v732 = vunpack.c.l.bf16 %v688
  %v733 = vunpack.c.h.bf16 %v688
  %v734 = vunpack.c.l.bf16 %v689
  %v735 = vunpack.c.h.bf16 %v689
  %v736 = vunpack.c.l.bf16 %v690
  %v737 = vunpack.c.h.bf16 %v690
  %v738 = vunpack.c.l.bf16 %v691
  %v739 = vunpack.c.h.bf16 %v691
  %v740 = vunpack.c.l.bf16 %v692
  %v741 = vunpack.c.h.bf16 %v692
  %v742 = vunpack.c.l.bf16 %v693
  %v743 = vunpack.c.h.bf16 %v693
  %v744 = vunpack.c.l.bf16 %v694
  %v745 = vunpack.c.h.bf16 %v694
  %v746 = vunpack.c.l.bf16 %v695
  %v747 = vunpack.c.h.bf16 %v695
  %v748 = vunpack.c.l.bf16 %v696
  %v749 = vunpack.c.h.bf16 %v696
  %v750 = vunpack.c.l.bf16 %v697
  %v751 = vunpack.c.h.bf16 %v697
  %v752 = vunpack.c.l.bf16 %v698
  %v753 = vunpack.c.h.bf16 %v698
  %v754 = vunpack.c.l.bf16 %v699
  %v755 = vunpack.c.h.bf16 %v699
  %v756 = vunpack.c.l.bf16 %v700
  %v757 = vunpack.c.h.bf16 %v700
  %v758 = vunpack.c.l.bf16 %v701
  %v759 = vunpack.c.h.bf16 %v701
  %v760 = vunpack.c.l.bf16 %v702
  %v761 = vunpack.c.h.bf16 %v702
  %v762 = vunpack.c.l.bf16 %v703
  %v763 = vunpack.c.h.bf16 %v703
  %v764 = vunpack.c.l.bf16 %v704
  %v765 = vunpack.c.h.bf16 %v704
  %v766 = vunpack.c.l.bf16 %v705
  %v767 = vunpack.c.h.bf16 %v705
  %v768 = vunpack.c.l.bf16 %v706
  %v769 = vunpack.c.h.bf16 %v706
  %v770 = vunpack.c.l.bf16 %v707
  %v771 = vunpack.c.h.bf16 %v707
  %v772 = vld [vmem:[%s8 + $0x5] sm:$0xff]
  %v773 = vld [vmem:[%s8 + $0xd] sm:$0xff]
  %v776 = vperm.slane %v772, 0
  %v777 = vperm.slane %v772, 1
  %v778 = vperm.slane %v772, 2
  %v779 = vperm.slane %v772, 3
  %v780 = vperm.slane %v772, 4
  %v781 = vperm.slane %v772, 5
  %v782 = vperm.slane %v772, 6
  %v783 = vperm.slane %v772, 7
  %v784 = vperm.slane %v773, 0
  %v785 = vperm.slane %v773, 1
  %v786 = vperm.slane %v773, 2
  %v787 = vperm.slane %v773, 3
  %v788 = vperm.slane %v773, 4
  %v789 = vperm.slane %v773, 5
  %v790 = vperm.slane %v773, 6
  %v791 = vperm.slane %v773, 7
  %v808 = vsel %vm601, %v655, 0
  %810 = vmatpush.msra.mxu0 0.0
  %811 = vmatpush.msra.mxu0 0.0
  %812 = vmatpush.msra.mxu0 0.0
  %813 = vmatpush.msra.mxu0 0.0
  %814 = vmatpush.msra.mxu0 0.0
  %815 = vmatpush.msra.mxu0 0.0
  %816 = vmatpush.msra.mxu0 0.0
  %817 = vmatpush.msra.mxu0 0.0
  %818 = vmatpush.msra.mxu0 0.0
  %819 = vmatpush.msra.mxu0 0.0
  %820 = vmatpush.msra.mxu0 0.0
  %821 = vmatpush.msra.mxu0 0.0
  %822 = vmatpush.msra.mxu0 %v756
  %823 = vmatpush.msra.mxu0 %v740
  %824 = vmatpush.msra.mxu0 %v724
  %825 = vmatpush.msra.mxu0 %v708
  %826 = vmatmul.f32.gmra.mxu0 %v808
  %v827 = vpop.f32.mrf.mxu0
  %v828 = vadd.f32 %v776, %v827
  %829 = vdwg.mxu0
  %830 = vmatpush.msra.mxu0 0.0
  %831 = vmatpush.msra.mxu0 0.0
  %832 = vmatpush.msra.mxu0 0.0
  %833 = vmatpush.msra.mxu0 0.0
  %834 = vmatpush.msra.mxu0 0.0
  %835 = vmatpush.msra.mxu0 0.0
  %836 = vmatpush.msra.mxu0 0.0
  %837 = vmatpush.msra.mxu0 0.0
  %838 = vmatpush.msra.mxu0 0.0
  %839 = vmatpush.msra.mxu0 0.0
  %840 = vmatpush.msra.mxu0 0.0
  %841 = vmatpush.msra.mxu0 0.0
  %842 = vmatpush.msra.mxu0 %v757
  %843 = vmatpush.msra.mxu0 %v741
  %844 = vmatpush.msra.mxu0 %v725
  %845 = vmatpush.msra.mxu0 %v709
  %846 = vmatmul.f32.gmra.mxu0 %v808
  %v847 = vpop.f32.mrf.mxu0
  %v848 = vadd.f32 %v777, %v847
  %849 = vdwg.mxu0
  %850 = vmatpush.msra.mxu0 0.0
  %851 = vmatpush.msra.mxu0 0.0
  %852 = vmatpush.msra.mxu0 0.0
  %853 = vmatpush.msra.mxu0 0.0
  %854 = vmatpush.msra.mxu0 0.0
  %855 = vmatpush.msra.mxu0 0.0
  %856 = vmatpush.msra.mxu0 0.0
  %857 = vmatpush.msra.mxu0 0.0
  %858 = vmatpush.msra.mxu0 0.0
  %859 = vmatpush.msra.mxu0 0.0
  %860 = vmatpush.msra.mxu0 0.0
  %861 = vmatpush.msra.mxu0 0.0
  %862 = vmatpush.msra.mxu0 %v758
  %863 = vmatpush.msra.mxu0 %v742
  %864 = vmatpush.msra.mxu0 %v726
  %865 = vmatpush.msra.mxu0 %v710
  %866 = vmatmul.f32.gmra.mxu0 %v808
  %v867 = vpop.f32.mrf.mxu0
  %v868 = vadd.f32 %v778, %v867
  %869 = vdwg.mxu0
  %870 = vmatpush.msra.mxu0 0.0
  %871 = vmatpush.msra.mxu0 0.0
  %872 = vmatpush.msra.mxu0 0.0
  %873 = vmatpush.msra.mxu0 0.0
  %874 = vmatpush.msra.mxu0 0.0
  %875 = vmatpush.msra.mxu0 0.0
  %876 = vmatpush.msra.mxu0 0.0
  %877 = vmatpush.msra.mxu0 0.0
  %878 = vmatpush.msra.mxu0 0.0
  %879 = vmatpush.msra.mxu0 0.0
  %880 = vmatpush.msra.mxu0 0.0
  %881 = vmatpush.msra.mxu0 0.0
  %882 = vmatpush.msra.mxu0 %v759
  %883 = vmatpush.msra.mxu0 %v743
  %884 = vmatpush.msra.mxu0 %v727
  %885 = vmatpush.msra.mxu0 %v711
  %886 = vmatmul.f32.gmra.mxu0 %v808
  %v887 = vpop.f32.mrf.mxu0
  %v888 = vadd.f32 %v779, %v887
  %889 = vdwg.mxu0
  %890 = vmatpush.msra.mxu0 0.0
  %891 = vmatpush.msra.mxu0 0.0
  %892 = vmatpush.msra.mxu0 0.0
  %893 = vmatpush.msra.mxu0 0.0
  %894 = vmatpush.msra.mxu0 0.0
  %895 = vmatpush.msra.mxu0 0.0
  %896 = vmatpush.msra.mxu0 0.0
  %897 = vmatpush.msra.mxu0 0.0
  %898 = vmatpush.msra.mxu0 0.0
  %899 = vmatpush.msra.mxu0 0.0
  %900 = vmatpush.msra.mxu0 0.0
  %901 = vmatpush.msra.mxu0 0.0
  %902 = vmatpush.msra.mxu0 %v760
  %903 = vmatpush.msra.mxu0 %v744
  %904 = vmatpush.msra.mxu0 %v728
  %905 = vmatpush.msra.mxu0 %v712
  %906 = vmatmul.f32.gmra.mxu0 %v808
  %v907 = vpop.f32.mrf.mxu0
  %v908 = vadd.f32 %v780, %v907
  %909 = vdwg.mxu0
  %910 = vmatpush.msra.mxu0 0.0
  %911 = vmatpush.msra.mxu0 0.0
  %912 = vmatpush.msra.mxu0 0.0
  %913 = vmatpush.msra.mxu0 0.0
  %914 = vmatpush.msra.mxu0 0.0
  %915 = vmatpush.msra.mxu0 0.0
  %916 = vmatpush.msra.mxu0 0.0
  %917 = vmatpush.msra.mxu0 0.0
  %918 = vmatpush.msra.mxu0 0.0
  %919 = vmatpush.msra.mxu0 0.0
  %920 = vmatpush.msra.mxu0 0.0
  %921 = vmatpush.msra.mxu0 0.0
  %922 = vmatpush.msra.mxu0 %v761
  %923 = vmatpush.msra.mxu0 %v745
  %924 = vmatpush.msra.mxu0 %v729
  %925 = vmatpush.msra.mxu0 %v713
  %926 = vmatmul.f32.gmra.mxu0 %v808
  %v927 = vpop.f32.mrf.mxu0
  %v928 = vadd.f32 %v781, %v927
  %929 = vdwg.mxu0
  %930 = vmatpush.msra.mxu0 0.0
  %931 = vmatpush.msra.mxu0 0.0
  %932 = vmatpush.msra.mxu0 0.0
  %933 = vmatpush.msra.mxu0 0.0
  %934 = vmatpush.msra.mxu0 0.0
  %935 = vmatpush.msra.mxu0 0.0
  %936 = vmatpush.msra.mxu0 0.0
  %937 = vmatpush.msra.mxu0 0.0
  %938 = vmatpush.msra.mxu0 0.0
  %939 = vmatpush.msra.mxu0 0.0
  %940 = vmatpush.msra.mxu0 0.0
  %941 = vmatpush.msra.mxu0 0.0
  %942 = vmatpush.msra.mxu0 %v762
  %943 = vmatpush.msra.mxu0 %v746
  %944 = vmatpush.msra.mxu0 %v730
  %945 = vmatpush.msra.mxu0 %v714
  %946 = vmatmul.f32.gmra.mxu0 %v808
  %v947 = vpop.f32.mrf.mxu0
  %v948 = vadd.f32 %v782, %v947
  %949 = vdwg.mxu0
  %950 = vmatpush.msra.mxu0 0.0
  %951 = vmatpush.msra.mxu0 0.0
  %952 = vmatpush.msra.mxu0 0.0
  %953 = vmatpush.msra.mxu0 0.0
  %954 = vmatpush.msra.mxu0 0.0
  %955 = vmatpush.msra.mxu0 0.0
  %956 = vmatpush.msra.mxu0 0.0
  %957 = vmatpush.msra.mxu0 0.0
  %958 = vmatpush.msra.mxu0 0.0
  %959 = vmatpush.msra.mxu0 0.0
  %960 = vmatpush.msra.mxu0 0.0
  %961 = vmatpush.msra.mxu0 0.0
  %962 = vmatpush.msra.mxu0 %v763
  %963 = vmatpush.msra.mxu0 %v747
  %964 = vmatpush.msra.mxu0 %v731
  %965 = vmatpush.msra.mxu0 %v715
  %966 = vmatmul.f32.gmra.mxu0 %v808
  %v967 = vpop.f32.mrf.mxu0
  %v968 = vadd.f32 %v783, %v967
  %969 = vdwg.mxu0
  %970 = vmatpush.msra.mxu0 0.0
  %971 = vmatpush.msra.mxu0 0.0
  %972 = vmatpush.msra.mxu0 0.0
  %973 = vmatpush.msra.mxu0 0.0
  %974 = vmatpush.msra.mxu0 0.0
  %975 = vmatpush.msra.mxu0 0.0
  %976 = vmatpush.msra.mxu0 0.0
  %977 = vmatpush.msra.mxu0 0.0
  %978 = vmatpush.msra.mxu0 0.0
  %979 = vmatpush.msra.mxu0 0.0
  %980 = vmatpush.msra.mxu0 0.0
  %981 = vmatpush.msra.mxu0 0.0
  %982 = vmatpush.msra.mxu0 %v764
  %983 = vmatpush.msra.mxu0 %v748
  %984 = vmatpush.msra.mxu0 %v732
  %985 = vmatpush.msra.mxu0 %v716
  %986 = vmatmul.f32.gmra.mxu0 %v808
  %v987 = vpop.f32.mrf.mxu0
  %v988 = vadd.f32 %v784, %v987
  %989 = vdwg.mxu0
  %990 = vmatpush.msra.mxu0 0.0
  %991 = vmatpush.msra.mxu0 0.0
  %992 = vmatpush.msra.mxu0 0.0
  %993 = vmatpush.msra.mxu0 0.0
  %994 = vmatpush.msra.mxu0 0.0
  %995 = vmatpush.msra.mxu0 0.0
  %996 = vmatpush.msra.mxu0 0.0
  %997 = vmatpush.msra.mxu0 0.0
  %998 = vmatpush.msra.mxu0 0.0
  %999 = vmatpush.msra.mxu0 0.0
  %1000 = vmatpush.msra.mxu0 0.0
  %1001 = vmatpush.msra.mxu0 0.0
  %1002 = vmatpush.msra.mxu0 %v765
  %1003 = vmatpush.msra.mxu0 %v749
  %1004 = vmatpush.msra.mxu0 %v733
  %1005 = vmatpush.msra.mxu0 %v717
  %1006 = vmatmul.f32.gmra.mxu0 %v808
  %v1007 = vpop.f32.mrf.mxu0
  %v1008 = vadd.f32 %v785, %v1007
  %1009 = vdwg.mxu0
  %1010 = vmatpush.msra.mxu0 0.0
  %1011 = vmatpush.msra.mxu0 0.0
  %1012 = vmatpush.msra.mxu0 0.0
  %1013 = vmatpush.msra.mxu0 0.0
  %1014 = vmatpush.msra.mxu0 0.0
  %1015 = vmatpush.msra.mxu0 0.0
  %1016 = vmatpush.msra.mxu0 0.0
  %1017 = vmatpush.msra.mxu0 0.0
  %1018 = vmatpush.msra.mxu0 0.0
  %1019 = vmatpush.msra.mxu0 0.0
  %1020 = vmatpush.msra.mxu0 0.0
  %1021 = vmatpush.msra.mxu0 0.0
  %1022 = vmatpush.msra.mxu0 %v766
  %1023 = vmatpush.msra.mxu0 %v750
  %1024 = vmatpush.msra.mxu0 %v734
  %1025 = vmatpush.msra.mxu0 %v718
  %1026 = vmatmul.f32.gmra.mxu0 %v808
  %v1027 = vpop.f32.mrf.mxu0
  %v1028 = vadd.f32 %v786, %v1027
  %1029 = vdwg.mxu0
  %1030 = vmatpush.msra.mxu0 0.0
  %1031 = vmatpush.msra.mxu0 0.0
  %1032 = vmatpush.msra.mxu0 0.0
  %1033 = vmatpush.msra.mxu0 0.0
  %1034 = vmatpush.msra.mxu0 0.0
  %1035 = vmatpush.msra.mxu0 0.0
  %1036 = vmatpush.msra.mxu0 0.0
  %1037 = vmatpush.msra.mxu0 0.0
  %1038 = vmatpush.msra.mxu0 0.0
  %1039 = vmatpush.msra.mxu0 0.0
  %1040 = vmatpush.msra.mxu0 0.0
  %1041 = vmatpush.msra.mxu0 0.0
  %1042 = vmatpush.msra.mxu0 %v767
  %1043 = vmatpush.msra.mxu0 %v751
  %1044 = vmatpush.msra.mxu0 %v735
  %1045 = vmatpush.msra.mxu0 %v719
  %1046 = vmatmul.f32.gmra.mxu0 %v808
  %v1047 = vpop.f32.mrf.mxu0
  %v1048 = vadd.f32 %v787, %v1047
  %1049 = vdwg.mxu0
  %1050 = vmatpush.msra.mxu0 0.0
  %1051 = vmatpush.msra.mxu0 0.0
  %1052 = vmatpush.msra.mxu0 0.0
  %1053 = vmatpush.msra.mxu0 0.0
  %1054 = vmatpush.msra.mxu0 0.0
  %1055 = vmatpush.msra.mxu0 0.0
  %1056 = vmatpush.msra.mxu0 0.0
  %1057 = vmatpush.msra.mxu0 0.0
  %1058 = vmatpush.msra.mxu0 0.0
  %1059 = vmatpush.msra.mxu0 0.0
  %1060 = vmatpush.msra.mxu0 0.0
  %1061 = vmatpush.msra.mxu0 0.0
  %1062 = vmatpush.msra.mxu0 %v768
  %1063 = vmatpush.msra.mxu0 %v752
  %1064 = vmatpush.msra.mxu0 %v736
  %1065 = vmatpush.msra.mxu0 %v720
  %1066 = vmatmul.f32.gmra.mxu0 %v808
  %v1067 = vpop.f32.mrf.mxu0
  %v1068 = vadd.f32 %v788, %v1067
  %1069 = vdwg.mxu0
  %1070 = vmatpush.msra.mxu0 0.0
  %1071 = vmatpush.msra.mxu0 0.0
  %1072 = vmatpush.msra.mxu0 0.0
  %1073 = vmatpush.msra.mxu0 0.0
  %1074 = vmatpush.msra.mxu0 0.0
  %1075 = vmatpush.msra.mxu0 0.0
  %1076 = vmatpush.msra.mxu0 0.0
  %1077 = vmatpush.msra.mxu0 0.0
  %1078 = vmatpush.msra.mxu0 0.0
  %1079 = vmatpush.msra.mxu0 0.0
  %1080 = vmatpush.msra.mxu0 0.0
  %1081 = vmatpush.msra.mxu0 0.0
  %1082 = vmatpush.msra.mxu0 %v769
  %1083 = vmatpush.msra.mxu0 %v753
  %1084 = vmatpush.msra.mxu0 %v737
  %1085 = vmatpush.msra.mxu0 %v721
  %1086 = vmatmul.f32.gmra.mxu0 %v808
  %v1087 = vpop.f32.mrf.mxu0
  %v1088 = vadd.f32 %v789, %v1087
  %1089 = vdwg.mxu0
  %1090 = vmatpush.msra.mxu0 0.0
  %1091 = vmatpush.msra.mxu0 0.0
  %1092 = vmatpush.msra.mxu0 0.0
  %1093 = vmatpush.msra.mxu0 0.0
  %1094 = vmatpush.msra.mxu0 0.0
  %1095 = vmatpush.msra.mxu0 0.0
  %1096 = vmatpush.msra.mxu0 0.0
  %1097 = vmatpush.msra.mxu0 0.0
  %1098 = vmatpush.msra.mxu0 0.0
  %1099 = vmatpush.msra.mxu0 0.0
  %1100 = vmatpush.msra.mxu0 0.0
  %1101 = vmatpush.msra.mxu0 0.0
  %1102 = vmatpush.msra.mxu0 %v770
  %1103 = vmatpush.msra.mxu0 %v754
  %1104 = vmatpush.msra.mxu0 %v738
  %1105 = vmatpush.msra.mxu0 %v722
  %1106 = vmatmul.f32.gmra.mxu0 %v808
  %v1107 = vpop.f32.mrf.mxu0
  %v1108 = vadd.f32 %v790, %v1107
  %1109 = vdwg.mxu0
  %1110 = vmatpush.msra.mxu0 0.0
  %1111 = vmatpush.msra.mxu0 0.0
  %1112 = vmatpush.msra.mxu0 0.0
  %1113 = vmatpush.msra.mxu0 0.0
  %1114 = vmatpush.msra.mxu0 0.0
  %1115 = vmatpush.msra.mxu0 0.0
  %1116 = vmatpush.msra.mxu0 0.0
  %1117 = vmatpush.msra.mxu0 0.0
  %1118 = vmatpush.msra.mxu0 0.0
  %1119 = vmatpush.msra.mxu0 0.0
  %1120 = vmatpush.msra.mxu0 0.0
  %1121 = vmatpush.msra.mxu0 0.0
  %1122 = vmatpush.msra.mxu0 %v771
  %1123 = vmatpush.msra.mxu0 %v755
  %1124 = vmatpush.msra.mxu0 %v739
  %1125 = vmatpush.msra.mxu0 %v723
  %1126 = vmatmul.f32.gmra.mxu0 %v808
  %v1127 = vpop.f32.mrf.mxu0
  %v1128 = vadd.f32 %v791, %v1127
  %1129 = vdwg.mxu0
  %v1130 = vmax.f32 %v828, 0.0
  %v1131 = vmax.f32 %v848, 0.0
  %v1132 = vmax.f32 %v868, 0.0
  %v1133 = vmax.f32 %v888, 0.0
  %v1134 = vmax.f32 %v908, 0.0
  %v1135 = vmax.f32 %v928, 0.0
  %v1136 = vmax.f32 %v948, 0.0
  %v1137 = vmax.f32 %v968, 0.0
  %v1138 = vmax.f32 %v988, 0.0
  %v1139 = vmax.f32 %v1008, 0.0
  %v1140 = vmax.f32 %v1028, 0.0
  %v1141 = vmax.f32 %v1048, 0.0
  %v1142 = vmax.f32 %v1068, 0.0
  %v1143 = vmax.f32 %v1088, 0.0
  %v1144 = vmax.f32 %v1108, 0.0
  %v1145 = vmax.f32 %v1128, 0.0
  %1146 = vst [vmem:[#allocation2] sm:$0x3] 0.0
  %1147 = vst [vmem:[#allocation2 + $0x22] sm:$0x3] 0.0
  %1148 = vst [vmem:[#allocation2 + $0x2] sm:$0x3] %v1130
  %1149 = vst [vmem:[#allocation2 + $0x4] sm:$0x3] %v1131
  %1150 = vst [vmem:[#allocation2 + $0x6] sm:$0x3] %v1132
  %1151 = vst [vmem:[#allocation2 + $0x8] sm:$0x3] %v1133
  %1152 = vst [vmem:[#allocation2 + $0xa] sm:$0x3] %v1134
  %1153 = vst [vmem:[#allocation2 + $0xc] sm:$0x3] %v1135
  %1154 = vst [vmem:[#allocation2 + $0xe] sm:$0x3] %v1136
  %1155 = vst [vmem:[#allocation2 + $0x10] sm:$0x3] %v1137
  %1156 = vst [vmem:[#allocation2 + $0x12] sm:$0x3] %v1138
  %1157 = vst [vmem:[#allocation2 + $0x14] sm:$0x3] %v1139
  %1158 = vst [vmem:[#allocation2 + $0x16] sm:$0x3] %v1140
  %1159 = vst [vmem:[#allocation2 + $0x18] sm:$0x3] %v1141
  %1160 = vst [vmem:[#allocation2 + $0x1a] sm:$0x3] %v1142
  %1161 = vst [vmem:[#allocation2 + $0x1c] sm:$0x3] %v1143
  %1162 = vst [vmem:[#allocation2 + $0x1e] sm:$0x3] %v1144
  %1163 = vst [vmem:[#allocation2 + $0x20] sm:$0x3] %v1145
  %v1164 = vld [vmem:[#allocation2] sm:$0xff]
  %v1165 = vld [vmem:[#allocation2 + $0x8] sm:$0xff]
  %v1166 = vld [vmem:[#allocation2 + $0x10] sm:$0xff]
  %v1167 = vld [vmem:[#allocation2 + $0x18] sm:$0xff]
  %v1168 = vld [vmem:[#allocation2 + $0x2] sm:$0xff]
  %v1169 = vld [vmem:[#allocation2 + $0xa] sm:$0xff]
  %v1170 = vld [vmem:[#allocation2 + $0x12] sm:$0xff]
  %v1171 = vld [vmem:[#allocation2 + $0x1a] sm:$0xff]
  %v1172 = vld [vmem:[#allocation2 + $0x4] sm:$0xff]
  %v1173 = vld [vmem:[#allocation2 + $0xc] sm:$0xff]
  %v1174 = vld [vmem:[#allocation2 + $0x14] sm:$0xff]
  %v1175 = vld [vmem:[#allocation2 + $0x1c] sm:$0xff]
  %v1176 = vld [vmem:[%s7] sm:$0xff]
  %v1177 = vld [vmem:[%s7 + $0x8] sm:$0xff]
  %v1178 = vld [vmem:[%s7 + $0x10] sm:$0xff]
  %v1179 = vld [vmem:[%s7 + $0x18] sm:$0xff]
  %v1180 = vld [vmem:[%s7 + $0x20] sm:$0xff]
  %v1181 = vld [vmem:[%s7 + $0x28] sm:$0xff]
  %v1182 = vld [vmem:[%s7 + $0x30] sm:$0xff]
  %v1183 = vld [vmem:[%s7 + $0x38] sm:$0xff]
  %v1184 = vld [vmem:[%s7 + $0x40] sm:$0xff]
  %v1185 = vld [vmem:[%s7 + $0x48] sm:$0xff]
  %v1186 = vld [vmem:[%s7 + $0x50] sm:$0xff]
  %v1187 = vld [vmem:[%s7 + $0x58] sm:$0xff]
  %v1188 = vld [vmem:[%s7 + $0x60] sm:$0xff]
  %v1189 = vld [vmem:[%s7 + $0x68] sm:$0xff]
  %v1190 = vld [vmem:[%s7 + $0x70] sm:$0xff]
  %v1191 = vld [vmem:[%s7 + $0x78] sm:$0xff]
  %v1192 = vld [vmem:[%s7 + $0x80] sm:$0xff]
  %v1193 = vld [vmem:[%s7 + $0x88] sm:$0xff]
  %v1194 = vld [vmem:[%s7 + $0x90] sm:$0xff]
  %v1195 = vld [vmem:[%s7 + $0x98] sm:$0xff]
  %v1196 = vld [vmem:[%s7 + $0xa0] sm:$0xff]
  %v1197 = vld [vmem:[%s7 + $0xa8] sm:$0xff]
  %v1198 = vld [vmem:[%s7 + $0xb0] sm:$0xff]
  %v1199 = vld [vmem:[%s7 + $0xb8] sm:$0xff]
  %v1200 = vld [vmem:[%s7 + $0xc0] sm:$0xff]
  %v1201 = vld [vmem:[%s7 + $0xc8] sm:$0xff]
  %v1202 = vld [vmem:[%s7 + $0xd0] sm:$0xff]
  %v1203 = vld [vmem:[%s7 + $0xd8] sm:$0xff]
  %v1204 = vld [vmem:[%s7 + $0xe0] sm:$0xff]
  %v1205 = vld [vmem:[%s7 + $0xe8] sm:$0xff]
  %v1206 = vld [vmem:[%s7 + $0xf0] sm:$0xff]
  %v1207 = vld [vmem:[%s7 + $0xf8] sm:$0xff]
  %v1208 = vld [vmem:[%s7 + $0x100] sm:$0xff]
  %v1209 = vld [vmem:[%s7 + $0x108] sm:$0xff]
  %v1210 = vld [vmem:[%s7 + $0x110] sm:$0xff]
  %v1211 = vld [vmem:[%s7 + $0x118] sm:$0xff]
  %v1212 = vld [vmem:[%s7 + $0x120] sm:$0xff]
  %v1213 = vld [vmem:[%s7 + $0x128] sm:$0xff]
  %v1214 = vld [vmem:[%s7 + $0x130] sm:$0xff]
  %v1215 = vld [vmem:[%s7 + $0x138] sm:$0xff]
  %v1216 = vld [vmem:[%s7 + $0x140] sm:$0xff]
  %v1217 = vld [vmem:[%s7 + $0x148] sm:$0xff]
  %v1218 = vld [vmem:[%s7 + $0x150] sm:$0xff]
  %v1219 = vld [vmem:[%s7 + $0x158] sm:$0xff]
  %v1220 = vld [vmem:[%s7 + $0x160] sm:$0xff]
  %v1221 = vld [vmem:[%s7 + $0x168] sm:$0xff]
  %v1222 = vld [vmem:[%s7 + $0x170] sm:$0xff]
  %v1223 = vld [vmem:[%s7 + $0x178] sm:$0xff]
  %v1224 = vld [vmem:[%s8 + $0x4] sm:$0x1]
  %v1226 = vperm.slane %v1224, 0
  %1228 = vmatpush.msra.mxu0 %v1191
  %1229 = vmatpush.msra.mxu0 %v1190
  %1230 = vmatpush.msra.mxu0 %v1189
  %1231 = vmatpush.msra.mxu0 %v1188
  %1232 = vmatpush.msra.mxu0 %v1187
  %1233 = vmatpush.msra.mxu0 %v1186
  %1234 = vmatpush.msra.mxu0 %v1185
  %1235 = vmatpush.msra.mxu0 %v1184
  %1236 = vmatpush.msra.mxu0 %v1183
  %1237 = vmatpush.msra.mxu0 %v1182
  %1238 = vmatpush.msra.mxu0 %v1181
  %1239 = vmatpush.msra.mxu0 %v1180
  %1240 = vmatpush.msra.mxu0 %v1179
  %1241 = vmatpush.msra.mxu0 %v1178
  %1242 = vmatpush.msra.mxu0 %v1177
  %1243 = vmatpush.msra.mxu0 %v1176
  %1244 = vmatmul.f32.gmra.mxu0 %v1164
  %v1245 = vpop.f32.mrf.mxu0
  %v1246 = vadd.f32 %v1226, %v1245
  %1247 = vmatmul.f32.gmra.mxu0 %v1165
  %v1248 = vpop.f32.mrf.mxu0
  %v1249 = vadd.f32 %v1226, %v1248
  %1250 = vmatmul.f32.gmra.mxu0 %v1166
  %v1251 = vpop.f32.mrf.mxu0
  %v1252 = vadd.f32 %v1226, %v1251
  %1253 = vmatmul.f32.gmra.mxu0 %v1167
  %v1254 = vpop.f32.mrf.mxu0
  %v1255 = vadd.f32 %v1226, %v1254
  %1256 = vdwg.mxu0
  %1257 = vmatpush.msra.mxu0 %v1207
  %1258 = vmatpush.msra.mxu0 %v1206
  %1259 = vmatpush.msra.mxu0 %v1205
  %1260 = vmatpush.msra.mxu0 %v1204
  %1261 = vmatpush.msra.mxu0 %v1203
  %1262 = vmatpush.msra.mxu0 %v1202
  %1263 = vmatpush.msra.mxu0 %v1201
  %1264 = vmatpush.msra.mxu0 %v1200
  %1265 = vmatpush.msra.mxu0 %v1199
  %1266 = vmatpush.msra.mxu0 %v1198
  %1267 = vmatpush.msra.mxu0 %v1197
  %1268 = vmatpush.msra.mxu0 %v1196
  %1269 = vmatpush.msra.mxu0 %v1195
  %1270 = vmatpush.msra.mxu0 %v1194
  %1271 = vmatpush.msra.mxu0 %v1193
  %1272 = vmatpush.msra.mxu0 %v1192
  %1273 = vmatmul.f32.gmra.mxu0 %v1168
  %v1274 = vpop.f32.mrf.mxu0
  %v1275 = vadd.f32 %v1246, %v1274
  %1276 = vmatmul.f32.gmra.mxu0 %v1169
  %v1277 = vpop.f32.mrf.mxu0
  %v1278 = vadd.f32 %v1249, %v1277
  %1279 = vmatmul.f32.gmra.mxu0 %v1170
  %v1280 = vpop.f32.mrf.mxu0
  %v1281 = vadd.f32 %v1252, %v1280
  %1282 = vmatmul.f32.gmra.mxu0 %v1171
  %v1283 = vpop.f32.mrf.mxu0
  %v1284 = vadd.f32 %v1255, %v1283
  %1285 = vdwg.mxu0
  %1286 = vmatpush.msra.mxu0 %v1223
  %1287 = vmatpush.msra.mxu0 %v1222
  %1288 = vmatpush.msra.mxu0 %v1221
  %1289 = vmatpush.msra.mxu0 %v1220
  %1290 = vmatpush.msra.mxu0 %v1219
  %1291 = vmatpush.msra.mxu0 %v1218
  %1292 = vmatpush.msra.mxu0 %v1217
  %1293 = vmatpush.msra.mxu0 %v1216
  %1294 = vmatpush.msra.mxu0 %v1215
  %1295 = vmatpush.msra.mxu0 %v1214
  %1296 = vmatpush.msra.mxu0 %v1213
  %1297 = vmatpush.msra.mxu0 %v1212
  %1298 = vmatpush.msra.mxu0 %v1211
  %1299 = vmatpush.msra.mxu0 %v1210
  %1300 = vmatpush.msra.mxu0 %v1209
  %1301 = vmatpush.msra.mxu0 %v1208
  %1302 = vmatmul.f32.gmra.mxu0 %v1172
  %v1303 = vpop.f32.mrf.mxu0
  %v1304 = vadd.f32 %v1275, %v1303
  %1305 = vmatmul.f32.gmra.mxu0 %v1173
  %v1306 = vpop.f32.mrf.mxu0
  %v1307 = vadd.f32 %v1278, %v1306
  %1308 = vmatmul.f32.gmra.mxu0 %v1174
  %v1309 = vpop.f32.mrf.mxu0
  %v1310 = vadd.f32 %v1281, %v1309
  %1311 = vmatmul.f32.gmra.mxu0 %v1175
  %v1312 = vpop.f32.mrf.mxu0
  %v1313 = vadd.f32 %v1284, %v1312
  %1314 = vdwg.mxu0
  %1315 = vst [vmem:[%s10] sm:$0xff] %v1304
  %1316 = vst [vmem:[%s10 + $0x8] sm:$0xff] %v1307
  %1317 = vst [vmem:[%s10 + $0x10] sm:$0xff] %v1310
  %1318 = vst [vmem:[%s10 + $0x18] sm:$0xff] %v1313
  // Predicated region
  $region38: #{base_net_forward.1} parent=0 // pred_check
    _
  $region39: #{base_net_forward.1} parent=0 // pred_check_branch
    %1320 = sbr.rel (0) target = $region41
  $region40: #{base_net_forward.1} parent=0 // pred_region
    _
  $region41: #{base_net_forward.1} parent=0 // pred_fallthru
    _
  // Predicated region
  $region42: #{base_net_forward.1} parent=0 // pred_check
    _
  $region43: #{base_net_forward.1} parent=0 // pred_check_branch
    %1322 = sbr.rel (0) target = $region45
  $region44: #{base_net_forward.1} parent=0 // pred_region
    _
  $region45: #{base_net_forward.1} parent=0 // pred_fallthru
    _
  // Predicated region
  $region46: #{base_net_forward.1} parent=0 // pred_check
    _
  $region47: #{base_net_forward.1} parent=0 // pred_check_branch
    %1324 = sbr.rel (0) target = $region49
  $region48: #{base_net_forward.1} parent=0 // pred_region
    _
  $region49: #{base_net_forward.1} parent=0 // pred_fallthru
    _
  // Predicated region
  $region50: #{base_net_forward.1} parent=0 // pred_check
    _
  $region51: #{base_net_forward.1} parent=0 // pred_check_branch
    %1326 = sbr.rel (0) target = $region53
  $region52: #{base_net_forward.1} parent=0 // pred_region
    _
  $region53: #{base_net_forward.1} parent=0 // pred_fallthru
    _

</llo_original>
